<compile_context>
chip_gen: v5e
topology: v5e:2x2
jax: 0.10.0
libtpu: 0.0.40
codegen_flags: <defaults>
</compile_context>

<pallas_src>
import functools

import jax
import jax.numpy as jnp
from jax.experimental import pallas as pl
from jax.experimental.pallas import tpu as pltpu


# ---------------------------------------------------------------------------
# Fused kernel body: conv1+BN1+ReLU -> VMEM halo scratch -> conv2+BN2 +
# shortcut (identity or fused 1x1 conv + BN) + add + ReLU.
# ---------------------------------------------------------------------------
def _residual_block_kernel(xg_ref, w1_ref, s1_ref, b1_ref,
                           w2_ref, s2_ref, b2_ref, *rest,
                           ho, wo, cin, cout, stride, n_wg, row_chunks, proj):
    if proj:
        wsc_ref, ssc_ref, bsc_ref, o_ref, h1_ref = rest
    else:
        o_ref, h1_ref = rest

    bf = h1_ref.dtype
    kdim = stride * cin

    # Zero only the four halo border strips; the interior is overwritten below.
    h1_ref[pl.ds(0, 1), :, :] = jnp.zeros((1, wo + 2, cout), bf)
    h1_ref[pl.ds(ho + 1, 1), :, :] = jnp.zeros((1, wo + 2, cout), bf)
    h1_ref[:, pl.ds(0, 1), :] = jnp.zeros((ho + 2, 1, cout), bf)
    h1_ref[:, pl.ds(wo + 1, 1), :] = jnp.zeros((ho + 2, 1, cout), bf)

    # ---- pass 1: conv1 (3x3, stride s, pad 1) + BN1 + ReLU -> VMEM halo ----
    for r0, rh in row_chunks:
        acc = None
        g = 0
        for ih in range(3):
            hgo, hs = divmod(ih, stride)
            for wgo in range(n_wg):
                # (rh, wo, stride*cin) shifted window; full lane range read
                # (fused W-taps), weights are zero-padded where needed.
                xv = xg_ref[0, pl.ds(r0 + hgo, rh), hs, pl.ds(wgo, wo), :]
                d = jnp.dot(xv.reshape(rh * wo, kdim), w1_ref[g],
                            preferred_element_type=jnp.float32)
                acc = d if acc is None else acc + d
                g += 1
        y = jnp.maximum(acc * s1_ref[...] + b1_ref[...], 0.0)
        h1_ref[pl.ds(r0 + 1, rh), pl.ds(1, wo), :] = (
            y.reshape(rh, wo, cout).astype(bf))

    # ---- pass 2: conv2 (3x3, s=1, pad 1) + BN2 + shortcut + add + ReLU -----
    # Residual pixel (i*s, j*s) in the grouped/padded layout:
    hg_off, h_sub = divmod(1, stride)
    wg_off = 1 // stride
    for r0, rh in row_chunks:
        acc = None
        for ih in range(3):
            for iw in range(3):
                xv = h1_ref[pl.ds(r0 + ih, rh), pl.ds(iw, wo), :]
                d = jnp.dot(xv.reshape(rh * wo, cout), w2_ref[ih * 3 + iw],
                            preferred_element_type=jnp.float32)
                acc = d if acc is None else acc + d
        y = acc * s2_ref[...] + b2_ref[...]

        sc_x = xg_ref[0, pl.ds(r0 + hg_off, rh), h_sub, pl.ds(wg_off, wo), :]
        if proj:
            # 1x1-conv shortcut: weights zero-padded to K = stride*cin so the
            # full lane range can be read (no lane sub-slice), then folded BN.
            sc = jnp.dot(sc_x.reshape(rh * wo, kdim), wsc_ref[...],
                         preferred_element_type=jnp.float32)
            sc = sc * ssc_ref[...] + bsc_ref[...]
        else:
            # identity shortcut (stride == 1, cin == cout): read the interior
            # of the same grouped input (bf16 precision, as before).
            sc = sc_x.reshape(rh * wo, cout).astype(jnp.float32)

        y = jnp.maximum(y + sc, 0.0)
        o_ref[0, pl.ds(r0, rh), :, :] = y.reshape(rh, wo, cout).astype(o_ref.dtype)


# ---------------------------------------------------------------------------
# Wrapper (NCHW in / NCHW out, matching the PyTorch module)
# ---------------------------------------------------------------------------
def fold_bn(gamma, beta, mean, var, eps=1e-5):
    scale = gamma / jnp.sqrt(var + eps)
    return scale, beta - mean * scale


def _vec(v, cout):
    return v.reshape(1, cout).astype(jnp.float32)


def _row_chunks(ho, wo, cout, target_bytes=96 * 1024):
    """Static (start, rows) chunks so the f32 accumulator stays small."""
    th = max(1, min(ho, target_bytes // max(1, wo * cout * 4)))
    chunks, r = [], 0
    while r < ho:
        rh = min(th, ho - r)
        chunks.append((r, rh))
        r += rh
    return tuple(chunks)


def residual_block_forward(x_nchw, params, *, stride):
    assert stride in (1, 2), "ResNet basic block uses stride 1 or 2"
    x = jnp.transpose(x_nchw, (0, 2, 3, 1))                  # NCHW -> NHWC
    n, h, w, cin = x.shape
    cout = params["conv1"].shape[0]
    proj = "conv_sc" in params

    ho = (h + 2 - 3) // stride + 1
    wo = (w + 2 - 3) // stride + 1
    s1, b1 = fold_bn(*params["bn1"])
    s2, b2 = fold_bn(*params["bn2"])

    # Grouped zero-padded layout: padded row r lives at (group r//s, sub r%s),
    # padded col c at (group c//s, lanes (c%s)*Cin : (c%s+1)*Cin).  Every
    # in-kernel tap slice is then static and contiguous.
    hg = ho + (2 // stride)
    wg = wo + (2 // stride)
    hp, wp = hg * stride, wg * stride
    assert hp >= h + 2 and wp >= w + 2
    xpad = jnp.pad(x, ((0, 0), (1, hp - h - 1), (1, wp - w - 1), (0, 0)))
    xg = xpad.reshape(n, hg, stride, wg, stride * cin).astype(jnp.bfloat16)

    # conv1 weights packed per (ih, w-group): K = stride*Cin, zero rows where a
    # fused tap falls outside the 3x3 window (W-tap fusion for stride 2).
    kdim = stride * cin
    n_wg = (2 // stride) + 1
    w1_hwio = jnp.transpose(params["conv1"], (2, 3, 1, 0))   # (3,3,Cin,Cout)
    slabs = []
    for ih in range(3):
        for wgo in range(n_wg):
            slab = jnp.zeros((kdim, cout), jnp.float32)
            for ws in range(stride):
                iw = wgo * stride + ws
                if iw < 3:
                    slab = slab.at[ws * cin:(ws + 1) * cin, :].set(w1_hwio[ih, iw])
            slabs.append(slab)
    w1 = jnp.stack(slabs).astype(jnp.bfloat16)               # (3*n_wg, K, Cout)

    w2 = (jnp.transpose(params["conv2"], (2, 3, 1, 0))
          .reshape(9, cout, cout).astype(jnp.bfloat16))

    row_chunks = _row_chunks(ho, wo, cout)

    vec_spec = pl.BlockSpec((1, cout), lambda i: (0, 0))
    in_specs = [
        pl.BlockSpec((1, hg, stride, wg, kdim), lambda i: (i, 0, 0, 0, 0)),
        pl.BlockSpec((3 * n_wg, kdim, cout), lambda i: (0, 0, 0)),
        vec_spec, vec_spec,
        pl.BlockSpec((9, cout, cout), lambda i: (0, 0, 0)),
        vec_spec, vec_spec,
    ]
    args = [xg, w1, _vec(s1, cout), _vec(b1, cout), w2,
            _vec(s2, cout), _vec(b2, cout)]

    flops = 2 * n * ho * wo * (3 * n_wg * kdim * cout + 9 * cout * cout)
    wbytes = w1.size * 2 + w2.size * 2 + 4 * cout * 4

    if proj:
        ssc, bsc = fold_bn(*params["bn_sc"])
        wsc = jnp.transpose(params["conv_sc"], (2, 3, 1, 0)).reshape(cin, cout)
        off = (1 % stride) * cin
        wsc_p = (jnp.zeros((kdim, cout), jnp.float32)
                 .at[off:off + cin, :].set(wsc).astype(jnp.bfloat16))
        in_specs += [pl.BlockSpec((kdim, cout), lambda i: (0, 0)),
                     vec_spec, vec_spec]
        args += [wsc_p, _vec(ssc, cout), _vec(bsc, cout)]
        flops += 2 * n * ho * wo * kdim * cout
        wbytes += wsc_p.size * 2 + 2 * cout * 4
    else:
        assert stride == 1 and cin == cout, (
            "identity shortcut requires stride==1 and in_channels==out_channels")

    out_shape = jax.ShapeDtypeStruct((n, ho, wo, cout), jnp.float32)
    out_specs = pl.BlockSpec((1, ho, wo, cout), lambda i: (i, 0, 0, 0))
    scratch = [pltpu.VMEM((ho + 2, wo + 2, cout), jnp.bfloat16)]

    # VMEM budget: double-buffered per-image blocks + weights + halo scratch,
    # capped at v7x's 64 MiB physical VMEM.
    blk_in = hg * stride * wg * kdim * 2
    blk_out = ho * wo * cout * 4
    scratch_b = (ho + 2) * (wo + 2) * cout * 2
    vmem_need = 2 * (blk_in + blk_out + wbytes) + scratch_b + (4 << 20)
    vmem_limit = int(min(64 * 2 ** 20, max(32 * 2 ** 20, vmem_need)))

    bytes_accessed = int(xg.size * 2 + wbytes + n * ho * wo * cout * 4)

    kernel = functools.partial(
        _residual_block_kernel, ho=ho, wo=wo, cin=cin, cout=cout,
        stride=stride, n_wg=n_wg, row_chunks=row_chunks, proj=proj)

    out = pl.pallas_call(
        kernel,
        grid=(n,),
        in_specs=in_specs,
        out_specs=out_specs,
        out_shape=out_shape,
        scratch_shapes=scratch,
        compiler_params=pltpu.CompilerParams(
            dimension_semantics=("parallel",),
            vmem_limit_bytes=vmem_limit),
        cost_estimate=pl.CostEstimate(flops=flops, transcendentals=0,
                                      bytes_accessed=bytes_accessed),
    )(*args)

    return jnp.transpose(out, (0, 3, 1, 2))                  # NHWC -> NCHW


# ---------------------------------------------------------------------------
# Pure-JAX reference (lax.conv), same bf16-into-MXU precision model
# ---------------------------------------------------------------------------
def _ref_conv(x_nhwc, w_oihw, stride, pad):
    return jax.lax.conv_general_dilated(
        x_nhwc, jnp.transpose(w_oihw, (2, 3, 1, 0)).astype(jnp.bfloat16),
        window_strides=(stride, stride), padding=((pad, pad), (pad, pad)),
        dimension_numbers=("NHWC", "HWIO", "NHWC"),
        preferred_element_type=jnp.float32)


def residual_block_ref(x_nchw, params, *, stride):
    x = jnp.transpose(x_nchw, (0, 2, 3, 1)).astype(jnp.bfloat16)
    s1, b1 = fold_bn(*params["bn1"])
    s2, b2 = fold_bn(*params["bn2"])
    out = jnp.maximum(_ref_conv(x, params["conv1"], stride, 1) * s1 + b1, 0.0)
    out = _ref_conv(out.astype(jnp.bfloat16), params["conv2"], 1, 1) * s2 + b2
    if "conv_sc" in params:
        ssc, bsc = fold_bn(*params["bn_sc"])
        sc = _ref_conv(x, params["conv_sc"], stride, 0) * ssc + bsc
    else:
        sc = x.astype(jnp.float32)
    out = jnp.maximum(out + sc, 0.0)
    return jnp.transpose(out, (0, 3, 1, 2))


# ---------------------------------------------------------------------------
def make_params(key, in_ch, out_ch, stride):
    ks = jax.random.split(key, 12)

    def bn(k0, k1, k2, k3, c):
        gamma = 0.5 + jax.random.uniform(k0, (c,), jnp.float32)
        beta = 0.1 * jax.random.normal(k1, (c,), jnp.float32)
        mean = 0.1 * jax.random.normal(k2, (c,), jnp.float32)
        var = 0.5 + jax.random.uniform(k3, (c,), jnp.float32)
        return (gamma, beta, mean, var)

    params = {
        "conv1": 0.1 * jax.random.normal(ks[0], (out_ch, in_ch, 3, 3), jnp.float32),
        "bn1": bn(ks[1], ks[2], ks[3], ks[4], out_ch),
        "conv2": 0.1 * jax.random.normal(ks[5], (out_ch, out_ch, 3, 3), jnp.float32),
        "bn2": bn(ks[6], ks[7], ks[8], ks[9], out_ch),
    }
    if stride != 1 or in_ch != out_ch:
        params["conv_sc"] = 0.1 * jax.random.normal(
            ks[10], (out_ch, in_ch, 1, 1), jnp.float32)
        params["bn_sc"] = bn(ks[11], ks[2], ks[3], ks[4], out_ch)
    return params


if __name__ == "__main__":
    key = jax.random.PRNGKey(0)
    k_x, k_p, k_x2, k_p2 = jax.random.split(key, 4)

    # Case 1: projection shortcut (stride=2, channel change).
    N, C_IN, C_OUT, H, W, STRIDE = 2, 4, 8, 16, 16, 2
    x = jax.random.normal(k_x, (N, C_IN, H, W), jnp.float32)
    params = make_params(k_p, C_IN, C_OUT, STRIDE)
    out = jax.block_until_ready(residual_block_forward(x, params, stride=STRIDE))
    ref = jax.block_until_ready(residual_block_ref(x, params, stride=STRIDE))
    assert out.shape == (N, C_OUT, H // STRIDE, W // STRIDE), out.shape
    err = float(jnp.max(jnp.abs(out - ref)))
    assert jnp.allclose(out, ref, atol=2e-2, rtol=2e-2), err

    # Case 2: identity shortcut (stride=1, same channels).
    N2, C2, H2, W2 = 2, 8, 8, 8
    x2 = jax.random.normal(k_x2, (N2, C2, H2, W2), jnp.float32)
    params2 = make_params(k_p2, C2, C2, 1)
    out2 = jax.block_until_ready(residual_block_forward(x2, params2, stride=1))
    ref2 = jax.block_until_ready(residual_block_ref(x2, params2, stride=1))
    assert out2.shape == (N2, C2, H2, W2), out2.shape
    err2 = float(jnp.max(jnp.abs(out2 - ref2)))
    assert jnp.allclose(out2, ref2, atol=2e-2, rtol=2e-2), err2

    print("KERNEL_OK")
</pallas_src>

<mosaic_0001>
module attributes {stable_mosaic.version = 11 : i64} {
  func.func @_residual_block_kernel(%arg0: i32, %arg1: memref<1x9x2x9x8xbf16, #tpu.memory_space<vmem>>, %arg2: memref<6x8x8xbf16, #tpu.memory_space<vmem>>, %arg3: memref<1x8xf32, #tpu.memory_space<vmem>>, %arg4: memref<1x8xf32, #tpu.memory_space<vmem>>, %arg5: memref<9x8x8xbf16, #tpu.memory_space<vmem>>, %arg6: memref<1x8xf32, #tpu.memory_space<vmem>>, %arg7: memref<1x8xf32, #tpu.memory_space<vmem>>, %arg8: memref<8x8xbf16, #tpu.memory_space<vmem>>, %arg9: memref<1x8xf32, #tpu.memory_space<vmem>>, %arg10: memref<1x8xf32, #tpu.memory_space<vmem>>, %arg11: memref<1x8x8x8xf32, #tpu.memory_space<vmem>>, %arg12: memref<10x10x8xbf16, #tpu.memory_space<vmem>>) attributes {dimension_semantics = [#tpu.dimension_semantics<parallel>], iteration_bounds = array<i64: 2>, scalar_prefetch = 0 : i64, scratch_operands = 1 : i64, tpu.core_type = #tpu.core_type<tc>, window_params = [{transform_indices = @transform_0, window_bounds = array<i64: 1, 9, 2, 9, 8>}, {pipeline_mode = #tpu.pipeline_mode<synchronous>, transform_indices = @transform_1, window_bounds = array<i64: 6, 8, 8>}, {pipeline_mode = #tpu.pipeline_mode<synchronous>, transform_indices = @transform_2, window_bounds = array<i64: 1, 8>}, {pipeline_mode = #tpu.pipeline_mode<synchronous>, transform_indices = @transform_3, window_bounds = array<i64: 1, 8>}, {pipeline_mode = #tpu.pipeline_mode<synchronous>, transform_indices = @transform_4, window_bounds = array<i64: 9, 8, 8>}, {pipeline_mode = #tpu.pipeline_mode<synchronous>, transform_indices = @transform_5, window_bounds = array<i64: 1, 8>}, {pipeline_mode = #tpu.pipeline_mode<synchronous>, transform_indices = @transform_6, window_bounds = array<i64: 1, 8>}, {pipeline_mode = #tpu.pipeline_mode<synchronous>, transform_indices = @transform_7, window_bounds = array<i64: 8, 8>}, {pipeline_mode = #tpu.pipeline_mode<synchronous>, transform_indices = @transform_8, window_bounds = array<i64: 1, 8>}, {pipeline_mode = #tpu.pipeline_mode<synchronous>, transform_indices = @transform_9, window_bounds = array<i64: 1, 8>}, {transform_indices = @transform_10, window_bounds = array<i64: 1, 8, 8, 8>}]} {
    %cst = arith.constant 0.000000e+00 : bf16
    %0 = vector.broadcast %cst : bf16 to vector<1x10x8xbf16>
    %c0 = arith.constant 0 : index
    %c0_0 = arith.constant 0 : index
    %c0_1 = arith.constant 0 : index
    %1 = vector.load %arg12[%c0, %c0_0, %c0_1] : memref<10x10x8xbf16, #tpu.memory_space<vmem>>, vector<1x10x8xbf16>
    tpu.vector_store %arg12[%c0, %c0_0, %c0_1], %0 {strides = array<i32>} : memref<10x10x8xbf16, #tpu.memory_space<vmem>>, vector<1x10x8xbf16>,
    %cst_2 = arith.constant 0.000000e+00 : bf16
    %2 = vector.broadcast %cst_2 : bf16 to vector<1x10x8xbf16>
    %c9 = arith.constant 9 : index
    %c0_3 = arith.constant 0 : index
    %c0_4 = arith.constant 0 : index
    %3 = vector.load %arg12[%c9, %c0_3, %c0_4] : memref<10x10x8xbf16, #tpu.memory_space<vmem>>, vector<1x10x8xbf16>
    tpu.vector_store %arg12[%c9, %c0_3, %c0_4], %2 {strides = array<i32>} : memref<10x10x8xbf16, #tpu.memory_space<vmem>>, vector<1x10x8xbf16>,
    %cst_5 = arith.constant 0.000000e+00 : bf16
    %4 = vector.broadcast %cst_5 : bf16 to vector<10x1x8xbf16>
    %c0_6 = arith.constant 0 : index
    %c0_7 = arith.constant 0 : index
    %c0_8 = arith.constant 0 : index
    %5 = vector.load %arg12[%c0_6, %c0_7, %c0_8] : memref<10x10x8xbf16, #tpu.memory_space<vmem>>, vector<10x1x8xbf16>
    tpu.vector_store %arg12[%c0_6, %c0_7, %c0_8], %4 {strides = array<i32>} : memref<10x10x8xbf16, #tpu.memory_space<vmem>>, vector<10x1x8xbf16>,
    %cst_9 = arith.constant 0.000000e+00 : bf16
    %6 = vector.broadcast %cst_9 : bf16 to vector<10x1x8xbf16>
    %c0_10 = arith.constant 0 : index
    %c9_11 = arith.constant 9 : index
    %c0_12 = arith.constant 0 : index
    %7 = vector.load %arg12[%c0_10, %c9_11, %c0_12] : memref<10x10x8xbf16, #tpu.memory_space<vmem>>, vector<10x1x8xbf16>
    tpu.vector_store %arg12[%c0_10, %c9_11, %c0_12], %6 {strides = array<i32>} : memref<10x10x8xbf16, #tpu.memory_space<vmem>>, vector<10x1x8xbf16>,
    %c0_13 = arith.constant 0 : index
    %c0_14 = arith.constant 0 : index
    %c0_15 = arith.constant 0 : index
    %c0_16 = arith.constant 0 : index
    %c0_17 = arith.constant 0 : index
    %8 = vector.load %arg1[%c0_13, %c0_14, %c0_15, %c0_16, %c0_17] : memref<1x9x2x9x8xbf16, #tpu.memory_space<vmem>>, vector<1x8x1x8x8xbf16>
    %9 = vector.shape_cast %8 : vector<1x8x1x8x8xbf16> to vector<8x8x8xbf16>
    %10 = vector.shape_cast %9 : vector<8x8x8xbf16> to vector<64x8xbf16>
    %c0_18 = arith.constant 0 : index
    %c0_19 = arith.constant 0 : index
    %c0_20 = arith.constant 0 : index
    %11 = vector.load %arg2[%c0_18, %c0_19, %c0_20] : memref<6x8x8xbf16, #tpu.memory_space<vmem>>, vector<1x8x8xbf16>
    %12 = vector.shape_cast %11 : vector<1x8x8xbf16> to vector<8x8xbf16>
    %cst_21 = arith.constant dense<0.000000e+00> : vector<64x8xf32>
    %13 = tpu.matmul %10, %12, %cst_21 {dimension_numbers = #tpu.dot_dimension_numbers<[1], [0], [0], [1], [0, 0, 1, 1], [], []>} : vector<64x8xbf16>, vector<8x8xbf16>, vector<64x8xf32> -> vector<64x8xf32>
    %c0_22 = arith.constant 0 : index
    %c0_23 = arith.constant 0 : index
    %c0_24 = arith.constant 0 : index
    %c1 = arith.constant 1 : index
    %c0_25 = arith.constant 0 : index
    %14 = vector.load %arg1[%c0_22, %c0_23, %c0_24, %c1, %c0_25] : memref<1x9x2x9x8xbf16, #tpu.memory_space<vmem>>, vector<1x8x1x8x8xbf16>
    %15 = vector.shape_cast %14 : vector<1x8x1x8x8xbf16> to vector<8x8x8xbf16>
    %16 = vector.shape_cast %15 : vector<8x8x8xbf16> to vector<64x8xbf16>
    %c1_26 = arith.constant 1 : index
    %c0_27 = arith.constant 0 : index
    %c0_28 = arith.constant 0 : index
    %17 = vector.load %arg2[%c1_26, %c0_27, %c0_28] : memref<6x8x8xbf16, #tpu.memory_space<vmem>>, vector<1x8x8xbf16>
    %18 = vector.shape_cast %17 : vector<1x8x8xbf16> to vector<8x8xbf16>
    %cst_29 = arith.constant dense<0.000000e+00> : vector<64x8xf32>
    %19 = tpu.matmul %16, %18, %cst_29 {dimension_numbers = #tpu.dot_dimension_numbers<[1], [0], [0], [1], [0, 0, 1, 1], [], []>} : vector<64x8xbf16>, vector<8x8xbf16>, vector<64x8xf32> -> vector<64x8xf32>
    %20 = arith.addf %13, %19 : vector<64x8xf32>
    %c0_30 = arith.constant 0 : index
    %c0_31 = arith.constant 0 : index
    %c1_32 = arith.constant 1 : index
    %c0_33 = arith.constant 0 : index
    %c0_34 = arith.constant 0 : index
    %21 = vector.load %arg1[%c0_30, %c0_31, %c1_32, %c0_33, %c0_34] : memref<1x9x2x9x8xbf16, #tpu.memory_space<vmem>>, vector<1x8x1x8x8xbf16>
    %22 = vector.shape_cast %21 : vector<1x8x1x8x8xbf16> to vector<8x8x8xbf16>
    %23 = vector.shape_cast %22 : vector<8x8x8xbf16> to vector<64x8xbf16>
    %c2 = arith.constant 2 : index
    %c0_35 = arith.constant 0 : index
    %c0_36 = arith.constant 0 : index
    %24 = vector.load %arg2[%c2, %c0_35, %c0_36] : memref<6x8x8xbf16, #tpu.memory_space<vmem>>, vector<1x8x8xbf16>
    %25 = vector.shape_cast %24 : vector<1x8x8xbf16> to vector<8x8xbf16>
    %cst_37 = arith.constant dense<0.000000e+00> : vector<64x8xf32>
    %26 = tpu.matmul %23, %25, %cst_37 {dimension_numbers = #tpu.dot_dimension_numbers<[1], [0], [0], [1], [0, 0, 1, 1], [], []>} : vector<64x8xbf16>, vector<8x8xbf16>, vector<64x8xf32> -> vector<64x8xf32>
    %27 = arith.addf %20, %26 : vector<64x8xf32>
    %c0_38 = arith.constant 0 : index
    %c0_39 = arith.constant 0 : index
    %c1_40 = arith.constant 1 : index
    %c1_41 = arith.constant 1 : index
    %c0_42 = arith.constant 0 : index
    %28 = vector.load %arg1[%c0_38, %c0_39, %c1_40, %c1_41, %c0_42] : memref<1x9x2x9x8xbf16, #tpu.memory_space<vmem>>, vector<1x8x1x8x8xbf16>
    %29 = vector.shape_cast %28 : vector<1x8x1x8x8xbf16> to vector<8x8x8xbf16>
    %30 = vector.shape_cast %29 : vector<8x8x8xbf16> to vector<64x8xbf16>
    %c3 = arith.constant 3 : index
    %c0_43 = arith.constant 0 : index
    %c0_44 = arith.constant 0 : index
    %31 = vector.load %arg2[%c3, %c0_43, %c0_44] : memref<6x8x8xbf16, #tpu.memory_space<vmem>>, vector<1x8x8xbf16>
    %32 = vector.shape_cast %31 : vector<1x8x8xbf16> to vector<8x8xbf16>
    %cst_45 = arith.constant dense<0.000000e+00> : vector<64x8xf32>
    %33 = tpu.matmul %30, %32, %cst_45 {dimension_numbers = #tpu.dot_dimension_numbers<[1], [0], [0], [1], [0, 0, 1, 1], [], []>} : vector<64x8xbf16>, vector<8x8xbf16>, vector<64x8xf32> -> vector<64x8xf32>
    %34 = arith.addf %27, %33 : vector<64x8xf32>
    %c0_46 = arith.constant 0 : index
    %c1_47 = arith.constant 1 : index
    %c0_48 = arith.constant 0 : index
    %c0_49 = arith.constant 0 : index
    %c0_50 = arith.constant 0 : index
    %35 = vector.load %arg1[%c0_46, %c1_47, %c0_48, %c0_49, %c0_50] : memref<1x9x2x9x8xbf16, #tpu.memory_space<vmem>>, vector<1x8x1x8x8xbf16>
    %36 = vector.shape_cast %35 : vector<1x8x1x8x8xbf16> to vector<8x8x8xbf16>
    %37 = vector.shape_cast %36 : vector<8x8x8xbf16> to vector<64x8xbf16>
    %c4 = arith.constant 4 : index
    %c0_51 = arith.constant 0 : index
    %c0_52 = arith.constant 0 : index
    %38 = vector.load %arg2[%c4, %c0_51, %c0_52] : memref<6x8x8xbf16, #tpu.memory_space<vmem>>, vector<1x8x8xbf16>
    %39 = vector.shape_cast %38 : vector<1x8x8xbf16> to vector<8x8xbf16>
    %cst_53 = arith.constant dense<0.000000e+00> : vector<64x8xf32>
    %40 = tpu.matmul %37, %39, %cst_53 {dimension_numbers = #tpu.dot_dimension_numbers<[1], [0], [0], [1], [0, 0, 1, 1], [], []>} : vector<64x8xbf16>, vector<8x8xbf16>, vector<64x8xf32> -> vector<64x8xf32>
    %41 = arith.addf %34, %40 : vector<64x8xf32>
    %c0_54 = arith.constant 0 : index
    %c1_55 = arith.constant 1 : index
    %c0_56 = arith.constant 0 : index
    %c1_57 = arith.constant 1 : index
    %c0_58 = arith.constant 0 : index
    %42 = vector.load %arg1[%c0_54, %c1_55, %c0_56, %c1_57, %c0_58] : memref<1x9x2x9x8xbf16, #tpu.memory_space<vmem>>, vector<1x8x1x8x8xbf16>
    %43 = vector.shape_cast %42 : vector<1x8x1x8x8xbf16> to vector<8x8x8xbf16>
    %44 = vector.shape_cast %43 : vector<8x8x8xbf16> to vector<64x8xbf16>
    %c5 = arith.constant 5 : index
    %c0_59 = arith.constant 0 : index
    %c0_60 = arith.constant 0 : index
    %45 = vector.load %arg2[%c5, %c0_59, %c0_60] : memref<6x8x8xbf16, #tpu.memory_space<vmem>>, vector<1x8x8xbf16>
    %46 = vector.shape_cast %45 : vector<1x8x8xbf16> to vector<8x8xbf16>
    %cst_61 = arith.constant dense<0.000000e+00> : vector<64x8xf32>
    %47 = tpu.matmul %44, %46, %cst_61 {dimension_numbers = #tpu.dot_dimension_numbers<[1], [0], [0], [1], [0, 0, 1, 1], [], []>} : vector<64x8xbf16>, vector<8x8xbf16>, vector<64x8xf32> -> vector<64x8xf32>
    %48 = arith.addf %41, %47 : vector<64x8xf32>
    %c0_62 = arith.constant 0 : index
    %c0_63 = arith.constant 0 : index
    %49 = vector.load %arg3[%c0_62, %c0_63] : memref<1x8xf32, #tpu.memory_space<vmem>>, vector<1x8xf32>
    %50 = vector.broadcast %49 : vector<1x8xf32> to vector<64x8xf32>
    %51 = arith.mulf %48, %50 : vector<64x8xf32>
    %c0_64 = arith.constant 0 : index
    %c0_65 = arith.constant 0 : index
    %52 = vector.load %arg4[%c0_64, %c0_65] : memref<1x8xf32, #tpu.memory_space<vmem>>, vector<1x8xf32>
    %53 = vector.broadcast %52 : vector<1x8xf32> to vector<64x8xf32>
    %54 = arith.addf %51, %53 : vector<64x8xf32>
    %cst_66 = arith.constant 0.000000e+00 : f32
    %55 = vector.broadcast %cst_66 : f32 to vector<64x8xf32>
    %56 = arith.maximumf %54, %55 : vector<64x8xf32>
    %57 = vector.shape_cast %56 : vector<64x8xf32> to vector<8x8x8xf32>
    %58 = arith.truncf %57 : vector<8x8x8xf32> to vector<8x8x8xbf16>
    %c1_67 = arith.constant 1 : index
    %c1_68 = arith.constant 1 : index
    %c0_69 = arith.constant 0 : index
    %59 = vector.load %arg12[%c1_67, %c1_68, %c0_69] : memref<10x10x8xbf16, #tpu.memory_space<vmem>>, vector<8x8x8xbf16>
    tpu.vector_store %arg12[%c1_67, %c1_68, %c0_69], %58 {strides = array<i32>} : memref<10x10x8xbf16, #tpu.memory_space<vmem>>, vector<8x8x8xbf16>,
    %c0_70 = arith.constant 0 : index
    %c0_71 = arith.constant 0 : index
    %c0_72 = arith.constant 0 : index
    %60 = vector.load %arg12[%c0_70, %c0_71, %c0_72] : memref<10x10x8xbf16, #tpu.memory_space<vmem>>, vector<8x8x8xbf16>
    %61 = vector.shape_cast %60 : vector<8x8x8xbf16> to vector<64x8xbf16>
    %c0_73 = arith.constant 0 : index
    %c0_74 = arith.constant 0 : index
    %c0_75 = arith.constant 0 : index
    %62 = vector.load %arg5[%c0_73, %c0_74, %c0_75] : memref<9x8x8xbf16, #tpu.memory_space<vmem>>, vector<1x8x8xbf16>
    %63 = vector.shape_cast %62 : vector<1x8x8xbf16> to vector<8x8xbf16>
    %cst_76 = arith.constant dense<0.000000e+00> : vector<64x8xf32>
    %64 = tpu.matmul %61, %63, %cst_76 {dimension_numbers = #tpu.dot_dimension_numbers<[1], [0], [0], [1], [0, 0, 1, 1], [], []>} : vector<64x8xbf16>, vector<8x8xbf16>, vector<64x8xf32> -> vector<64x8xf32>
    %c0_77 = arith.constant 0 : index
    %c1_78 = arith.constant 1 : index
    %c0_79 = arith.constant 0 : index
    %65 = vector.load %arg12[%c0_77, %c1_78, %c0_79] : memref<10x10x8xbf16, #tpu.memory_space<vmem>>, vector<8x8x8xbf16>
    %66 = vector.shape_cast %65 : vector<8x8x8xbf16> to vector<64x8xbf16>
    %c1_80 = arith.constant 1 : index
    %c0_81 = arith.constant 0 : index
    %c0_82 = arith.constant 0 : index
    %67 = vector.load %arg5[%c1_80, %c0_81, %c0_82] : memref<9x8x8xbf16, #tpu.memory_space<vmem>>, vector<1x8x8xbf16>
    %68 = vector.shape_cast %67 : vector<1x8x8xbf16> to vector<8x8xbf16>
    %cst_83 = arith.constant dense<0.000000e+00> : vector<64x8xf32>
    %69 = tpu.matmul %66, %68, %cst_83 {dimension_numbers = #tpu.dot_dimension_numbers<[1], [0], [0], [1], [0, 0, 1, 1], [], []>} : vector<64x8xbf16>, vector<8x8xbf16>, vector<64x8xf32> -> vector<64x8xf32>
    %70 = arith.addf %64, %69 : vector<64x8xf32>
    %c0_84 = arith.constant 0 : index
    %c2_85 = arith.constant 2 : index
    %c0_86 = arith.constant 0 : index
    %71 = vector.load %arg12[%c0_84, %c2_85, %c0_86] : memref<10x10x8xbf16, #tpu.memory_space<vmem>>, vector<8x8x8xbf16>
    %72 = vector.shape_cast %71 : vector<8x8x8xbf16> to vector<64x8xbf16>
    %c2_87 = arith.constant 2 : index
    %c0_88 = arith.constant 0 : index
    %c0_89 = arith.constant 0 : index
    %73 = vector.load %arg5[%c2_87, %c0_88, %c0_89] : memref<9x8x8xbf16, #tpu.memory_space<vmem>>, vector<1x8x8xbf16>
    %74 = vector.shape_cast %73 : vector<1x8x8xbf16> to vector<8x8xbf16>
    %cst_90 = arith.constant dense<0.000000e+00> : vector<64x8xf32>
    %75 = tpu.matmul %72, %74, %cst_90 {dimension_numbers = #tpu.dot_dimension_numbers<[1], [0], [0], [1], [0, 0, 1, 1], [], []>} : vector<64x8xbf16>, vector<8x8xbf16>, vector<64x8xf32> -> vector<64x8xf32>
    %76 = arith.addf %70, %75 : vector<64x8xf32>
    %c1_91 = arith.constant 1 : index
    %c0_92 = arith.constant 0 : index
    %c0_93 = arith.constant 0 : index
    %77 = vector.load %arg12[%c1_91, %c0_92, %c0_93] : memref<10x10x8xbf16, #tpu.memory_space<vmem>>, vector<8x8x8xbf16>
    %78 = vector.shape_cast %77 : vector<8x8x8xbf16> to vector<64x8xbf16>
    %c3_94 = arith.constant 3 : index
    %c0_95 = arith.constant 0 : index
    %c0_96 = arith.constant 0 : index
    %79 = vector.load %arg5[%c3_94, %c0_95, %c0_96] : memref<9x8x8xbf16, #tpu.memory_space<vmem>>, vector<1x8x8xbf16>
    %80 = vector.shape_cast %79 : vector<1x8x8xbf16> to vector<8x8xbf16>
    %cst_97 = arith.constant dense<0.000000e+00> : vector<64x8xf32>
    %81 = tpu.matmul %78, %80, %cst_97 {dimension_numbers = #tpu.dot_dimension_numbers<[1], [0], [0], [1], [0, 0, 1, 1], [], []>} : vector<64x8xbf16>, vector<8x8xbf16>, vector<64x8xf32> -> vector<64x8xf32>
    %82 = arith.addf %76, %81 : vector<64x8xf32>
    %c1_98 = arith.constant 1 : index
    %c1_99 = arith.constant 1 : index
    %c0_100 = arith.constant 0 : index
    %83 = vector.load %arg12[%c1_98, %c1_99, %c0_100] : memref<10x10x8xbf16, #tpu.memory_space<vmem>>, vector<8x8x8xbf16>
    %84 = vector.shape_cast %83 : vector<8x8x8xbf16> to vector<64x8xbf16>
    %c4_101 = arith.constant 4 : index
    %c0_102 = arith.constant 0 : index
    %c0_103 = arith.constant 0 : index
    %85 = vector.load %arg5[%c4_101, %c0_102, %c0_103] : memref<9x8x8xbf16, #tpu.memory_space<vmem>>, vector<1x8x8xbf16>
    %86 = vector.shape_cast %85 : vector<1x8x8xbf16> to vector<8x8xbf16>
    %cst_104 = arith.constant dense<0.000000e+00> : vector<64x8xf32>
    %87 = tpu.matmul %84, %86, %cst_104 {dimension_numbers = #tpu.dot_dimension_numbers<[1], [0], [0], [1], [0, 0, 1, 1], [], []>} : vector<64x8xbf16>, vector<8x8xbf16>, vector<64x8xf32> -> vector<64x8xf32>
    %88 = arith.addf %82, %87 : vector<64x8xf32>
    %c1_105 = arith.constant 1 : index
    %c2_106 = arith.constant 2 : index
    %c0_107 = arith.constant 0 : index
    %89 = vector.load %arg12[%c1_105, %c2_106, %c0_107] : memref<10x10x8xbf16, #tpu.memory_space<vmem>>, vector<8x8x8xbf16>
    %90 = vector.shape_cast %89 : vector<8x8x8xbf16> to vector<64x8xbf16>
    %c5_108 = arith.constant 5 : index
    %c0_109 = arith.constant 0 : index
    %c0_110 = arith.constant 0 : index
    %91 = vector.load %arg5[%c5_108, %c0_109, %c0_110] : memref<9x8x8xbf16, #tpu.memory_space<vmem>>, vector<1x8x8xbf16>
    %92 = vector.shape_cast %91 : vector<1x8x8xbf16> to vector<8x8xbf16>
    %cst_111 = arith.constant dense<0.000000e+00> : vector<64x8xf32>
    %93 = tpu.matmul %90, %92, %cst_111 {dimension_numbers = #tpu.dot_dimension_numbers<[1], [0], [0], [1], [0, 0, 1, 1], [], []>} : vector<64x8xbf16>, vector<8x8xbf16>, vector<64x8xf32> -> vector<64x8xf32>
    %94 = arith.addf %88, %93 : vector<64x8xf32>
    %c2_112 = arith.constant 2 : index
    %c0_113 = arith.constant 0 : index
    %c0_114 = arith.constant 0 : index
    %95 = vector.load %arg12[%c2_112, %c0_113, %c0_114] : memref<10x10x8xbf16, #tpu.memory_space<vmem>>, vector<8x8x8xbf16>
    %96 = vector.shape_cast %95 : vector<8x8x8xbf16> to vector<64x8xbf16>
    %c6 = arith.constant 6 : index
    %c0_115 = arith.constant 0 : index
    %c0_116 = arith.constant 0 : index
    %97 = vector.load %arg5[%c6, %c0_115, %c0_116] : memref<9x8x8xbf16, #tpu.memory_space<vmem>>, vector<1x8x8xbf16>
    %98 = vector.shape_cast %97 : vector<1x8x8xbf16> to vector<8x8xbf16>
    %cst_117 = arith.constant dense<0.000000e+00> : vector<64x8xf32>
    %99 = tpu.matmul %96, %98, %cst_117 {dimension_numbers = #tpu.dot_dimension_numbers<[1], [0], [0], [1], [0, 0, 1, 1], [], []>} : vector<64x8xbf16>, vector<8x8xbf16>, vector<64x8xf32> -> vector<64x8xf32>
    %100 = arith.addf %94, %99 : vector<64x8xf32>
    %c2_118 = arith.constant 2 : index
    %c1_119 = arith.constant 1 : index
    %c0_120 = arith.constant 0 : index
    %101 = vector.load %arg12[%c2_118, %c1_119, %c0_120] : memref<10x10x8xbf16, #tpu.memory_space<vmem>>, vector<8x8x8xbf16>
    %102 = vector.shape_cast %101 : vector<8x8x8xbf16> to vector<64x8xbf16>
    %c7 = arith.constant 7 : index
    %c0_121 = arith.constant 0 : index
    %c0_122 = arith.constant 0 : index
    %103 = vector.load %arg5[%c7, %c0_121, %c0_122] : memref<9x8x8xbf16, #tpu.memory_space<vmem>>, vector<1x8x8xbf16>
    %104 = vector.shape_cast %103 : vector<1x8x8xbf16> to vector<8x8xbf16>
    %cst_123 = arith.constant dense<0.000000e+00> : vector<64x8xf32>
    %105 = tpu.matmul %102, %104, %cst_123 {dimension_numbers = #tpu.dot_dimension_numbers<[1], [0], [0], [1], [0, 0, 1, 1], [], []>} : vector<64x8xbf16>, vector<8x8xbf16>, vector<64x8xf32> -> vector<64x8xf32>
    %106 = arith.addf %100, %105 : vector<64x8xf32>
    %c2_124 = arith.constant 2 : index
    %c2_125 = arith.constant 2 : index
    %c0_126 = arith.constant 0 : index
    %107 = vector.load %arg12[%c2_124, %c2_125, %c0_126] : memref<10x10x8xbf16, #tpu.memory_space<vmem>>, vector<8x8x8xbf16>
    %108 = vector.shape_cast %107 : vector<8x8x8xbf16> to vector<64x8xbf16>
    %c8 = arith.constant 8 : index
    %c0_127 = arith.constant 0 : index
    %c0_128 = arith.constant 0 : index
    %109 = vector.load %arg5[%c8, %c0_127, %c0_128] : memref<9x8x8xbf16, #tpu.memory_space<vmem>>, vector<1x8x8xbf16>
    %110 = vector.shape_cast %109 : vector<1x8x8xbf16> to vector<8x8xbf16>
    %cst_129 = arith.constant dense<0.000000e+00> : vector<64x8xf32>
    %111 = tpu.matmul %108, %110, %cst_129 {dimension_numbers = #tpu.dot_dimension_numbers<[1], [0], [0], [1], [0, 0, 1, 1], [], []>} : vector<64x8xbf16>, vector<8x8xbf16>, vector<64x8xf32> -> vector<64x8xf32>
    %112 = arith.addf %106, %111 : vector<64x8xf32>
    %c0_130 = arith.constant 0 : index
    %c0_131 = arith.constant 0 : index
    %113 = vector.load %arg6[%c0_130, %c0_131] : memref<1x8xf32, #tpu.memory_space<vmem>>, vector<1x8xf32>
    %114 = vector.broadcast %113 : vector<1x8xf32> to vector<64x8xf32>
    %115 = arith.mulf %112, %114 : vector<64x8xf32>
    %c0_132 = arith.constant 0 : index
    %c0_133 = arith.constant 0 : index
    %116 = vector.load %arg7[%c0_132, %c0_133] : memref<1x8xf32, #tpu.memory_space<vmem>>, vector<1x8xf32>
    %117 = vector.broadcast %116 : vector<1x8xf32> to vector<64x8xf32>
    %118 = arith.addf %115, %117 : vector<64x8xf32>
    %c0_134 = arith.constant 0 : index
    %c0_135 = arith.constant 0 : index
    %c1_136 = arith.constant 1 : index
    %c0_137 = arith.constant 0 : index
    %c0_138 = arith.constant 0 : index
    %119 = vector.load %arg1[%c0_134, %c0_135, %c1_136, %c0_137, %c0_138] : memref<1x9x2x9x8xbf16, #tpu.memory_space<vmem>>, vector<1x8x1x8x8xbf16>
    %120 = vector.shape_cast %119 : vector<1x8x1x8x8xbf16> to vector<8x8x8xbf16>
    %121 = vector.shape_cast %120 : vector<8x8x8xbf16> to vector<64x8xbf16>
    %c0_139 = arith.constant 0 : index
    %c0_140 = arith.constant 0 : index
    %122 = vector.load %arg8[%c0_139, %c0_140] : memref<8x8xbf16, #tpu.memory_space<vmem>>, vector<8x8xbf16>
    %cst_141 = arith.constant dense<0.000000e+00> : vector<64x8xf32>
    %123 = tpu.matmul %121, %122, %cst_141 {dimension_numbers = #tpu.dot_dimension_numbers<[1], [0], [0], [1], [0, 0, 1, 1], [], []>} : vector<64x8xbf16>, vector<8x8xbf16>, vector<64x8xf32> -> vector<64x8xf32>
    %c0_142 = arith.constant 0 : index
    %c0_143 = arith.constant 0 : index
    %124 = vector.load %arg9[%c0_142, %c0_143] : memref<1x8xf32, #tpu.memory_space<vmem>>, vector<1x8xf32>
    %125 = vector.broadcast %124 : vector<1x8xf32> to vector<64x8xf32>
    %126 = arith.mulf %123, %125 : vector<64x8xf32>
    %c0_144 = arith.constant 0 : index
    %c0_145 = arith.constant 0 : index
    %127 = vector.load %arg10[%c0_144, %c0_145] : memref<1x8xf32, #tpu.memory_space<vmem>>, vector<1x8xf32>
    %128 = vector.broadcast %127 : vector<1x8xf32> to vector<64x8xf32>
    %129 = arith.addf %126, %128 : vector<64x8xf32>
    %130 = arith.addf %118, %129 : vector<64x8xf32>
    %cst_146 = arith.constant 0.000000e+00 : f32
    %131 = vector.broadcast %cst_146 : f32 to vector<64x8xf32>
    %132 = arith.maximumf %130, %131 : vector<64x8xf32>
    %133 = vector.shape_cast %132 : vector<64x8xf32> to vector<8x8x8xf32>
    %c0_147 = arith.constant 0 : index
    %c0_148 = arith.constant 0 : index
    %c0_149 = arith.constant 0 : index
    %c0_150 = arith.constant 0 : index
    %134 = vector.load %arg11[%c0_147, %c0_148, %c0_149, %c0_150] : memref<1x8x8x8xf32, #tpu.memory_space<vmem>>, vector<1x8x8x8xf32>
    %135 = vector.shape_cast %134 : vector<1x8x8x8xf32> to vector<8x8x8xf32>
    %136 = vector.shape_cast %133 : vector<8x8x8xf32> to vector<1x8x8x8xf32>
    tpu.vector_store %arg11[%c0_147, %c0_148, %c0_149, %c0_150], %136 {strides = array<i32>} : memref<1x8x8x8xf32, #tpu.memory_space<vmem>>, vector<1x8x8x8xf32>,
    return
  }
  func.func @transform_0(%arg0: i32) -> (i32, i32, i32, i32, i32) {
    %c0_i32 = arith.constant 0 : i32
    %c0_i32_0 = arith.constant 0 : i32
    %c0_i32_1 = arith.constant 0 : i32
    %c0_i32_2 = arith.constant 0 : i32
    %c0_i32_3 = arith.constant 0 : i32
    return %arg0, %c0_i32, %c0_i32_0, %c0_i32_1, %c0_i32_2 : i32, i32, i32, i32, i32
  }
  func.func @transform_1(%arg0: i32) -> (i32, i32, i32) {
    %c0_i32 = arith.constant 0 : i32
    %c0_i32_0 = arith.constant 0 : i32
    %c0_i32_1 = arith.constant 0 : i32
    %c0_i32_2 = arith.constant 0 : i32
    return %c0_i32, %c0_i32_0, %c0_i32_1 : i32, i32, i32
  }
  func.func @transform_2(%arg0: i32) -> (i32, i32) {
    %c0_i32 = arith.constant 0 : i32
    %c0_i32_0 = arith.constant 0 : i32
    %c0_i32_1 = arith.constant 0 : i32
    return %c0_i32, %c0_i32_0 : i32, i32
  }
  func.func @transform_3(%arg0: i32) -> (i32, i32) {
    %c0_i32 = arith.constant 0 : i32
    %c0_i32_0 = arith.constant 0 : i32
    %c0_i32_1 = arith.constant 0 : i32
    return %c0_i32, %c0_i32_0 : i32, i32
  }
  func.func @transform_4(%arg0: i32) -> (i32, i32, i32) {
    %c0_i32 = arith.constant 0 : i32
    %c0_i32_0 = arith.constant 0 : i32
    %c0_i32_1 = arith.constant 0 : i32
    %c0_i32_2 = arith.constant 0 : i32
    return %c0_i32, %c0_i32_0, %c0_i32_1 : i32, i32, i32
  }
  func.func @transform_5(%arg0: i32) -> (i32, i32) {
    %c0_i32 = arith.constant 0 : i32
    %c0_i32_0 = arith.constant 0 : i32
    %c0_i32_1 = arith.constant 0 : i32
    return %c0_i32, %c0_i32_0 : i32, i32
  }
  func.func @transform_6(%arg0: i32) -> (i32, i32) {
    %c0_i32 = arith.constant 0 : i32
    %c0_i32_0 = arith.constant 0 : i32
    %c0_i32_1 = arith.constant 0 : i32
    return %c0_i32, %c0_i32_0 : i32, i32
  }
  func.func @transform_7(%arg0: i32) -> (i32, i32) {
    %c0_i32 = arith.constant 0 : i32
    %c0_i32_0 = arith.constant 0 : i32
    %c0_i32_1 = arith.constant 0 : i32
    return %c0_i32, %c0_i32_0 : i32, i32
  }
  func.func @transform_8(%arg0: i32) -> (i32, i32) {
    %c0_i32 = arith.constant 0 : i32
    %c0_i32_0 = arith.constant 0 : i32
    %c0_i32_1 = arith.constant 0 : i32
    return %c0_i32, %c0_i32_0 : i32, i32
  }
  func.func @transform_9(%arg0: i32) -> (i32, i32) {
    %c0_i32 = arith.constant 0 : i32
    %c0_i32_0 = arith.constant 0 : i32
    %c0_i32_1 = arith.constant 0 : i32
    return %c0_i32, %c0_i32_0 : i32, i32
  }
  func.func @transform_10(%arg0: i32) -> (i32, i32, i32, i32) {
    %c0_i32 = arith.constant 0 : i32
    %c0_i32_0 = arith.constant 0 : i32
    %c0_i32_1 = arith.constant 0 : i32
    %c0_i32_2 = arith.constant 0 : i32
    return %arg0, %c0_i32, %c0_i32_0, %c0_i32_1 : i32, i32, i32, i32
  }
}

</mosaic_0001>

<llo_original>
// kernel: tpu_custom_call.1
$region0: #{tpu_custom_call.1}
  #allocation0 [shape = 'u32[]', space=smem, size = 0x4, offset = 0x4, fixed_abs, tag = 'smem constant byte address 0x4 - core index']
  #allocation1 [shape = 'u32[72,128]{1,0:T(1,128)}', space=vmem, size = 0x9000, scoped, tag = 'internal scratch']
  #allocation2 [shape = 'bf16[10,10,8]{2,1,0:T(8,128)(2,1)}', space=vmem, size = 0xa000, scoped, tag = 'scratch operand']
  %s0 = inlined_call_operand.vmem [shape: bf16[2,9,2,9,8], index: 0, kind: input, shape index: {}]
  %s1 = inlined_call_operand.vmem [shape: bf16[6,8,8], index: 1, kind: input, shape index: {}]
  %s2 = inlined_call_operand.vmem [shape: f32[1,8], index: 2, kind: input, shape index: {}]
  %s3 = inlined_call_operand.vmem [shape: f32[1,8], index: 3, kind: input, shape index: {}]
  %s4 = inlined_call_operand.vmem [shape: bf16[9,8,8], index: 4, kind: input, shape index: {}]
  %s5 = inlined_call_operand.vmem [shape: f32[1,8], index: 5, kind: input, shape index: {}]
  %s6 = inlined_call_operand.vmem [shape: f32[1,8], index: 6, kind: input, shape index: {}]
  %s7 = inlined_call_operand.vmem [shape: bf16[8,8], index: 7, kind: input, shape index: {}]
  %s8 = inlined_call_operand.vmem [shape: f32[1,8], index: 8, kind: input, shape index: {}]
  %s9 = inlined_call_operand.vmem [shape: f32[1,8], index: 9, kind: input, shape index: {}]
  %s10 = inlined_call_operand.hbm [shape: f32[2,8,8,8], index: 10, kind: output, shape index: {}]
  %s11 = sld [smem:[#allocation0]]
  $region73: #{tpu_custom_call.1} parent=0
    _
  %s13 = ssub.s32 1, %s11
  %s14 = scalar_select 0, %s13, %s11
  $region1: #{tpu_custom_call.1} parent=0
    #allocation3 [shape = 'u8[65536]{0}', space=vmem, size = 0x10000, scoped, tag = 'output window, operand 0']
    #allocation4 [shape = 's32[2]{0}', space=sflag, size = 0x8, scoped, tag = 'scoped memory for tpu_custom_call.1']
    %15 = vsyncpa [#allocation4], 0
    %s16 = scalar_lea.sflag [#allocation4], 1
    %17 = vsyncpa %s16, 0
    loop: start=0, step=1, limit=4
    $region2: #{tpu_custom_call.1} parent=1 // loop_pre_header
      _
    $region3: #{tpu_custom_call.1} parent=1 // loop_header
      %s19 = sphi 0, %s23
      %p20 = scmp.ge.s32.totalorder %s19, 4
      %s29 = sphi 0, %s31
      %s32 = sphi 0, %s29
      %s33 = sphi 0, %s32
      %s49 = sphi 0, %s33
      %s53 = sphi 0, %s53
      %s55 = sphi 0, %s53
      %s56 = sphi 0, %s55
      %s70 = sphi 0, %s56
      %s74 = sphi 0, %s74
      %s76 = sphi 0, %s74
      %s77 = sphi 0, %s76
      %s91 = sphi 0, %s77
      %s95 = sphi 0, %s95
      %s97 = sphi 0, %s95
      %s98 = sphi 0, %s97
      %s112 = sphi 0, %s98
      %s116 = sphi 0, %s116
      %s118 = sphi 0, %s116
      %s119 = sphi 0, %s118
      %s133 = sphi 0, %s119
      %s137 = sphi 0, %s137
      %s139 = sphi 0, %s137
      %s140 = sphi 0, %s139
      %s154 = sphi 0, %s140
      %s158 = sphi 0, %s158
      %s160 = sphi 0, %s158
      %s161 = sphi 0, %s160
      %s175 = sphi 0, %s161
      %s179 = sphi 0, %s179
      %s181 = sphi 0, %s179
      %s182 = sphi 0, %s181
      %s196 = sphi 0, %s182
      %s200 = sphi 0, %s200
      %s202 = sphi 0, %s200
      %s203 = sphi 0, %s202
      %s217 = sphi 0, %s203
      %s221 = sphi 0, %s221
      %s223 = sphi 0, %s221
      %s224 = sphi 0, %s223
      %s238 = sphi 0, %s224
      %s244 = sphi 0, %s246
      %s247 = sphi 0, %s244
      %s248 = sphi 0, %s247
      %s264 = sphi 0, %s248
    $region4: #{tpu_custom_call.1} parent=1 // loop_header_branch
      %22 = sbr.rel (%p20) target = $region8
    $region5: #{tpu_custom_call.1} parent=1 // loop_body
      %s24 = ssub.s32 %s19, 1
      %s25 = ssub.s32 %s19, 2
      %s26 = sadd.s32 %s19, 1
      %s27 = ssub.s32 %s19, %s26
      %p28 = scmp.eq.s32.totalorder %s27, 0
      %s30 = sadd.s32 %s29, 1
      %s31 = scalar_select %p28, %s29, %s30
      %p34 = pneg %p28
      %p35 = scmp.eq.s32.totalorder %s19, 1
      %p36 = por %p34, %p35
      %p37 = scmp.ne.s32.totalorder %s29, %s32
      %p38 = scmp.eq.s32.totalorder %s19, 0
      %p39 = por %p37, %p38
      %p40 = scmp.ne.s32.totalorder %s29, %s32
      %p41 = scmp.eq.s32.totalorder %s24, 1
      %p42 = por %p40, %p41
      %p43 = scmp.ne.s32.totalorder %s32, %s33
      %p44 = scmp.eq.s32.totalorder %s24, 0
      %p45 = por %p43, %p44
      %p46 = scmp.ne.s32.totalorder %s32, %s33
      %p47 = scmp.eq.s32.totalorder %s25, 1
      %p48 = por %p46, %p47
      %p50 = scmp.ne.s32.totalorder %s33, %s49
      %p51 = scmp.eq.s32.totalorder %s25, 0
      %p52 = por %p50, %p51
      %s54 = sadd.s32 %s53, 1
      %p57 = scmp.eq.s32.totalorder %s19, 1
      %p58 = scmp.ne.s32.totalorder %s53, %s55
      %p59 = scmp.eq.s32.totalorder %s19, 0
      %p60 = por %p58, %p59
      %p61 = scmp.ne.s32.totalorder %s53, %s55
      %p62 = scmp.eq.s32.totalorder %s24, 1
      %p63 = por %p61, %p62
      %p64 = scmp.ne.s32.totalorder %s55, %s56
      %p65 = scmp.eq.s32.totalorder %s24, 0
      %p66 = por %p64, %p65
      %p67 = scmp.ne.s32.totalorder %s55, %s56
      %p68 = scmp.eq.s32.totalorder %s25, 1
      %p69 = por %p67, %p68
      %p71 = scmp.ne.s32.totalorder %s56, %s70
      %p72 = scmp.eq.s32.totalorder %s25, 0
      %p73 = por %p71, %p72
      %s75 = sadd.s32 %s74, 1
      %p78 = scmp.eq.s32.totalorder %s19, 1
      %p79 = scmp.ne.s32.totalorder %s74, %s76
      %p80 = scmp.eq.s32.totalorder %s19, 0
      %p81 = por %p79, %p80
      %p82 = scmp.ne.s32.totalorder %s74, %s76
      %p83 = scmp.eq.s32.totalorder %s24, 1
      %p84 = por %p82, %p83
      %p85 = scmp.ne.s32.totalorder %s76, %s77
      %p86 = scmp.eq.s32.totalorder %s24, 0
      %p87 = por %p85, %p86
      %p88 = scmp.ne.s32.totalorder %s76, %s77
      %p89 = scmp.eq.s32.totalorder %s25, 1
      %p90 = por %p88, %p89
      %p92 = scmp.ne.s32.totalorder %s77, %s91
      %p93 = scmp.eq.s32.totalorder %s25, 0
      %p94 = por %p92, %p93
      %s96 = sadd.s32 %s95, 1
      %p99 = scmp.eq.s32.totalorder %s19, 1
      %p100 = scmp.ne.s32.totalorder %s95, %s97
      %p101 = scmp.eq.s32.totalorder %s19, 0
      %p102 = por %p100, %p101
      %p103 = scmp.ne.s32.totalorder %s95, %s97
      %p104 = scmp.eq.s32.totalorder %s24, 1
      %p105 = por %p103, %p104
      %p106 = scmp.ne.s32.totalorder %s97, %s98
      %p107 = scmp.eq.s32.totalorder %s24, 0
      %p108 = por %p106, %p107
      %p109 = scmp.ne.s32.totalorder %s97, %s98
      %p110 = scmp.eq.s32.totalorder %s25, 1
      %p111 = por %p109, %p110
      %p113 = scmp.ne.s32.totalorder %s98, %s112
      %p114 = scmp.eq.s32.totalorder %s25, 0
      %p115 = por %p113, %p114
      %s117 = sadd.s32 %s116, 1
      %p120 = scmp.eq.s32.totalorder %s19, 1
      %p121 = scmp.ne.s32.totalorder %s116, %s118
      %p122 = scmp.eq.s32.totalorder %s19, 0
      %p123 = por %p121, %p122
      %p124 = scmp.ne.s32.totalorder %s116, %s118
      %p125 = scmp.eq.s32.totalorder %s24, 1
      %p126 = por %p124, %p125
      %p127 = scmp.ne.s32.totalorder %s118, %s119
      %p128 = scmp.eq.s32.totalorder %s24, 0
      %p129 = por %p127, %p128
      %p130 = scmp.ne.s32.totalorder %s118, %s119
      %p131 = scmp.eq.s32.totalorder %s25, 1
      %p132 = por %p130, %p131
      %p134 = scmp.ne.s32.totalorder %s119, %s133
      %p135 = scmp.eq.s32.totalorder %s25, 0
      %p136 = por %p134, %p135
      %s138 = sadd.s32 %s137, 1
      %p141 = scmp.eq.s32.totalorder %s19, 1
      %p142 = scmp.ne.s32.totalorder %s137, %s139
      %p143 = scmp.eq.s32.totalorder %s19, 0
      %p144 = por %p142, %p143
      %p145 = scmp.ne.s32.totalorder %s137, %s139
      %p146 = scmp.eq.s32.totalorder %s24, 1
      %p147 = por %p145, %p146
      %p148 = scmp.ne.s32.totalorder %s139, %s140
      %p149 = scmp.eq.s32.totalorder %s24, 0
      %p150 = por %p148, %p149
      %p151 = scmp.ne.s32.totalorder %s139, %s140
      %p152 = scmp.eq.s32.totalorder %s25, 1
      %p153 = por %p151, %p152
      %p155 = scmp.ne.s32.totalorder %s140, %s154
      %p156 = scmp.eq.s32.totalorder %s25, 0
      %p157 = por %p155, %p156
      %s159 = sadd.s32 %s158, 1
      %p162 = scmp.eq.s32.totalorder %s19, 1
      %p163 = scmp.ne.s32.totalorder %s158, %s160
      %p164 = scmp.eq.s32.totalorder %s19, 0
      %p165 = por %p163, %p164
      %p166 = scmp.ne.s32.totalorder %s158, %s160
      %p167 = scmp.eq.s32.totalorder %s24, 1
      %p168 = por %p166, %p167
      %p169 = scmp.ne.s32.totalorder %s160, %s161
      %p170 = scmp.eq.s32.totalorder %s24, 0
      %p171 = por %p169, %p170
      %p172 = scmp.ne.s32.totalorder %s160, %s161
      %p173 = scmp.eq.s32.totalorder %s25, 1
      %p174 = por %p172, %p173
      %p176 = scmp.ne.s32.totalorder %s161, %s175
      %p177 = scmp.eq.s32.totalorder %s25, 0
      %p178 = por %p176, %p177
      %s180 = sadd.s32 %s179, 1
      %p183 = scmp.eq.s32.totalorder %s19, 1
      %p184 = scmp.ne.s32.totalorder %s179, %s181
      %p185 = scmp.eq.s32.totalorder %s19, 0
      %p186 = por %p184, %p185
      %p187 = scmp.ne.s32.totalorder %s179, %s181
      %p188 = scmp.eq.s32.totalorder %s24, 1
      %p189 = por %p187, %p188
      %p190 = scmp.ne.s32.totalorder %s181, %s182
      %p191 = scmp.eq.s32.totalorder %s24, 0
      %p192 = por %p190, %p191
      %p193 = scmp.ne.s32.totalorder %s181, %s182
      %p194 = scmp.eq.s32.totalorder %s25, 1
      %p195 = por %p193, %p194
      %p197 = scmp.ne.s32.totalorder %s182, %s196
      %p198 = scmp.eq.s32.totalorder %s25, 0
      %p199 = por %p197, %p198
      %s201 = sadd.s32 %s200, 1
      %p204 = scmp.eq.s32.totalorder %s19, 1
      %p205 = scmp.ne.s32.totalorder %s200, %s202
      %p206 = scmp.eq.s32.totalorder %s19, 0
      %p207 = por %p205, %p206
      %p208 = scmp.ne.s32.totalorder %s200, %s202
      %p209 = scmp.eq.s32.totalorder %s24, 1
      %p210 = por %p208, %p209
      %p211 = scmp.ne.s32.totalorder %s202, %s203
      %p212 = scmp.eq.s32.totalorder %s24, 0
      %p213 = por %p211, %p212
      %p214 = scmp.ne.s32.totalorder %s202, %s203
      %p215 = scmp.eq.s32.totalorder %s25, 1
      %p216 = por %p214, %p215
      %p218 = scmp.ne.s32.totalorder %s203, %s217
      %p219 = scmp.eq.s32.totalorder %s25, 0
      %p220 = por %p218, %p219
      %s222 = sadd.s32 %s221, 1
      %p225 = scmp.eq.s32.totalorder %s19, 1
      %p226 = scmp.ne.s32.totalorder %s221, %s223
      %p227 = scmp.eq.s32.totalorder %s19, 0
      %p228 = por %p226, %p227
      %p229 = scmp.ne.s32.totalorder %s221, %s223
      %p230 = scmp.eq.s32.totalorder %s24, 1
      %p231 = por %p229, %p230
      %p232 = scmp.ne.s32.totalorder %s223, %s224
      %p233 = scmp.eq.s32.totalorder %s24, 0
      %p234 = por %p232, %p233
      %p235 = scmp.ne.s32.totalorder %s223, %s224
      %p236 = scmp.eq.s32.totalorder %s25, 1
      %p237 = por %p235, %p236
      %p239 = scmp.ne.s32.totalorder %s224, %s238
      %p240 = scmp.eq.s32.totalorder %s25, 0
      %p241 = por %p239, %p240
      %s242 = ssub.s32 %s19, %s26
      %p243 = scmp.eq.s32.totalorder %s242, 0
      %s245 = sadd.s32 %s244, 1
      %s246 = scalar_select %p243, %s244, %s245
      %p249 = pneg %p243
      %p250 = scmp.eq.s32.totalorder %s19, 1
      %p251 = por %p249, %p250
      %p252 = scmp.ne.s32.totalorder %s244, %s247
      %p253 = scmp.eq.s32.totalorder %s19, 0
      %p254 = por %p252, %p253
      %p255 = scmp.ne.s32.totalorder %s244, %s247
      %p256 = scmp.eq.s32.totalorder %s24, 1
      %p257 = por %p255, %p256
      %p258 = scmp.ne.s32.totalorder %s247, %s248
      %p259 = scmp.eq.s32.totalorder %s24, 0
      %p260 = por %p258, %p259
      %p261 = scmp.ne.s32.totalorder %s247, %s248
      %p262 = scmp.eq.s32.totalorder %s25, 1
      %p263 = por %p261, %p262
      %p265 = scmp.ne.s32.totalorder %s248, %s264
      %p266 = scmp.eq.s32.totalorder %s25, 0
      %p267 = por %p265, %p266
      %p268 = scmp.le.s32.totalorder 1, %s19
      %p269 = scmp.lt.s32.totalorder %s19, 3
      %p270 = pnand %p268, %p269
      %p271 = pneg %p270
      // Predicated region
      $region9: #{tpu_custom_call.1} parent=5 // pred_check
        _
      $region10: #{tpu_custom_call.1} parent=5 // pred_check_branch
        %273 = sbr.rel (%p270) target = $region12
      $region11: #{tpu_custom_call.1} parent=5 // pred_region
        %s274 = ssub.s32 %s19, 1
        // Predicated region
        $region13: #{tpu_custom_call.1} parent=11 // pred_check
          %p275 = pneg %p66
        $region14: #{tpu_custom_call.1} parent=11 // pred_check_branch
          %277 = sbr.rel (%p275) target = $region16
        $region15: #{tpu_custom_call.1} parent=11 // pred_region
          _
        $region16: #{tpu_custom_call.1} parent=11 // pred_fallthru
          _
        // Predicated region
        $region17: #{tpu_custom_call.1} parent=11 // pred_check
          %p278 = pneg %p87
        $region18: #{tpu_custom_call.1} parent=11 // pred_check_branch
          %280 = sbr.rel (%p278) target = $region20
        $region19: #{tpu_custom_call.1} parent=11 // pred_region
          _
        $region20: #{tpu_custom_call.1} parent=11 // pred_fallthru
          _
        // Predicated region
        $region21: #{tpu_custom_call.1} parent=11 // pred_check
          %p281 = pneg %p108
        $region22: #{tpu_custom_call.1} parent=11 // pred_check_branch
          %283 = sbr.rel (%p281) target = $region24
        $region23: #{tpu_custom_call.1} parent=11 // pred_region
          _
        $region24: #{tpu_custom_call.1} parent=11 // pred_fallthru
          _
        // Predicated region
        $region25: #{tpu_custom_call.1} parent=11 // pred_check
          %p284 = pneg %p129
        $region26: #{tpu_custom_call.1} parent=11 // pred_check_branch
          %286 = sbr.rel (%p284) target = $region28
        $region27: #{tpu_custom_call.1} parent=11 // pred_region
          _
        $region28: #{tpu_custom_call.1} parent=11 // pred_fallthru
          _
        // Predicated region
        $region29: #{tpu_custom_call.1} parent=11 // pred_check
          %p287 = pneg %p150
        $region30: #{tpu_custom_call.1} parent=11 // pred_check_branch
          %289 = sbr.rel (%p287) target = $region32
        $region31: #{tpu_custom_call.1} parent=11 // pred_region
          _
        $region32: #{tpu_custom_call.1} parent=11 // pred_fallthru
          _
        // Predicated region
        $region33: #{tpu_custom_call.1} parent=11 // pred_check
          %p290 = pneg %p171
        $region34: #{tpu_custom_call.1} parent=11 // pred_check_branch
          %292 = sbr.rel (%p290) target = $region36
        $region35: #{tpu_custom_call.1} parent=11 // pred_region
          _
        $region36: #{tpu_custom_call.1} parent=11 // pred_fallthru
          _
        // Predicated region
        $region37: #{tpu_custom_call.1} parent=11 // pred_check
          %p293 = pneg %p192
        $region38: #{tpu_custom_call.1} parent=11 // pred_check_branch
          %295 = sbr.rel (%p293) target = $region40
        $region39: #{tpu_custom_call.1} parent=11 // pred_region
          _
        $region40: #{tpu_custom_call.1} parent=11 // pred_fallthru
          _
        // Predicated region
        $region41: #{tpu_custom_call.1} parent=11 // pred_check
          %p296 = pneg %p213
        $region42: #{tpu_custom_call.1} parent=11 // pred_check_branch
          %298 = sbr.rel (%p296) target = $region44
        $region43: #{tpu_custom_call.1} parent=11 // pred_region
          _
        $region44: #{tpu_custom_call.1} parent=11 // pred_fallthru
          _
        // Predicated region
        $region45: #{tpu_custom_call.1} parent=11 // pred_check
          %p299 = pneg %p234
        $region46: #{tpu_custom_call.1} parent=11 // pred_check_branch
          %301 = sbr.rel (%p299) target = $region48
        $region47: #{tpu_custom_call.1} parent=11 // pred_region
          _
        $region48: #{tpu_custom_call.1} parent=11 // pred_fallthru
          _
      $region12: #{tpu_custom_call.1} parent=5 // pred_fallthru
        _
      %p302 = scmp.lt.s32.totalorder %s19, 2
      // Predicated region
      $region49: #{tpu_custom_call.1} parent=5 // pred_check
        %p303 = pneg %p302
      $region50: #{tpu_custom_call.1} parent=5 // pred_check_branch
        %305 = sbr.rel (%p303) target = $region52
      $region51: #{tpu_custom_call.1} parent=5 // pred_region
        // Predicated region
        $region53: #{tpu_custom_call.1} parent=51 // pred_check
          %p306 = pneg %p39
        $region54: #{tpu_custom_call.1} parent=51 // pred_check_branch
          %308 = sbr.rel (%p306) target = $region56
        $region55: #{tpu_custom_call.1} parent=51 // pred_region
          %p309 = scmp.lt.s32.totalorder %s19, 1
          %s310 = scalar_select %p309, %s19, 1
          %s311 = smul.addr %s310, 36
          %s312 = smul.addr %s311, 4
          %s313 = scalar_lea.vmem %s0, %s312
        $region56: #{tpu_custom_call.1} parent=51 // pred_fallthru
          _
      $region52: #{tpu_custom_call.1} parent=5 // pred_fallthru
        _
      %p314 = scmp.le.s32.totalorder 1, %s19
      %p315 = scmp.lt.s32.totalorder %s19, 3
      %p316 = pnand %p314, %p315
      %p317 = pneg %p316
      // Predicated region
      $region57: #{tpu_custom_call.1} parent=5 // pred_check
        _
      $region58: #{tpu_custom_call.1} parent=5 // pred_check_branch
        %319 = sbr.rel (%p316) target = $region60
      $region59: #{tpu_custom_call.1} parent=5 // pred_region
        %s320 = ssub.s32 %s19, 1
        %p321 = scmp.lt.s32.totalorder %s24, 1
        %s322 = scalar_select %p321, %s24, 1
        %s323 = smul.addr %s322, 36
        %s324 = smul.addr %s323, 4
        %s325 = scalar_lea.vmem %s0, %s324
        %p326 = pneg %p45
        %p327 = pneg %p42
        %p328 = pneg %p66
        %p329 = pneg %p63
        %p330 = pneg %p87
        %p331 = pneg %p84
        %p332 = pneg %p108
        %p333 = pneg %p105
        %p334 = pneg %p129
        %p335 = pneg %p126
        %p336 = pneg %p150
        %p337 = pneg %p147
        %p338 = pneg %p171
        %p339 = pneg %p168
        %p340 = pneg %p192
        %p341 = pneg %p189
        %p342 = pneg %p213
        %p343 = pneg %p210
        %p344 = pneg %p234
        %p345 = pneg %p231
        %p346 = pneg %p260
        %p347 = pneg %p257
        %s348 = sand.u32 %s247, 1
        %s349 = scalar_lea.sflag [#allocation4], %s348
        %s350 = sand.u32 %s247, 1
        %s351 = smul.addr %s350, 64
        %s352 = scalar_lea.vmem [#allocation3], %s351
        %p353 = scmp.lt.s32.totalorder %s24, 1
        %s354 = scalar_select %p353, %s24, 1
        %s355 = smul.addr %s354, 36
        %s356 = smul.addr %s355, 4
        %s357 = scalar_lea.vmem %s0, %s356
        %vm359 = vcmask 60416
        %360 = vst.msk [vmem:[#allocation2] sm:$0xf] %vm359, 0
        %vm361 = vcmask 57344
        %362 = vst.msk [vmem:[#allocation2 + $0x4] sm:$0x1] %vm361, 0
        %s363 = scalar_lea.vmem [#allocation2], 72
        %364 = vst.msk [vmem:[%s363] sm:$0xf] %vm359, 0
        %365 = vst.msk [vmem:[%s363 + $0x4] sm:$0x1] %vm361, 0
        %vm366 = vcmask 57344
        %vm367 = vsmask.f32 256
        %vm368 = vmand %vm366, %vm367
        %v369 = vld [vmem:[#allocation2] sm:$0x1]
        %v370 = vsel %vm368, 0, %v369
        %371 = vst [vmem:[#allocation2] sm:$0x1] %v370
        %v372 = vld [vmem:[#allocation2 + $0x8] sm:$0x1]
        %v373 = vsel %vm368, 0, %v372
        %374 = vst [vmem:[#allocation2 + $0x8] sm:$0x1] %v373
        %v375 = vld [vmem:[#allocation2 + $0x10] sm:$0x1]
        %v376 = vsel %vm368, 0, %v375
        %377 = vst [vmem:[#allocation2 + $0x10] sm:$0x1] %v376
        %v378 = vld [vmem:[#allocation2 + $0x18] sm:$0x1]
        %v379 = vsel %vm368, 0, %v378
        %380 = vst [vmem:[#allocation2 + $0x18] sm:$0x1] %v379
        %v381 = vld [vmem:[#allocation2 + $0x20] sm:$0x1]
        %v382 = vsel %vm368, 0, %v381
        %383 = vst [vmem:[#allocation2 + $0x20] sm:$0x1] %v382
        %v384 = vld [vmem:[#allocation2 + $0x28] sm:$0x1]
        %v385 = vsel %vm368, 0, %v384
        %386 = vst [vmem:[#allocation2 + $0x28] sm:$0x1] %v385
        %v387 = vld [vmem:[#allocation2 + $0x30] sm:$0x1]
        %v388 = vsel %vm368, 0, %v387
        %389 = vst [vmem:[#allocation2 + $0x30] sm:$0x1] %v388
        %v390 = vld [vmem:[#allocation2 + $0x38] sm:$0x1]
        %v391 = vsel %vm368, 0, %v390
        %392 = vst [vmem:[#allocation2 + $0x38] sm:$0x1] %v391
        %v393 = vld [vmem:[#allocation2 + $0x40] sm:$0x1]
        %v394 = vsel %vm368, 0, %v393
        %395 = vst [vmem:[#allocation2 + $0x40] sm:$0x1] %v394
        %v396 = vld [vmem:[#allocation2 + $0x48] sm:$0x1]
        %v397 = vsel %vm368, 0, %v396
        %398 = vst [vmem:[#allocation2 + $0x48] sm:$0x1] %v397
        %vm399 = vsmask.f32 7938
        %vm400 = vmand %vm366, %vm399
        %v401 = vld [vmem:[#allocation2 + $0x4] sm:$0x1]
        %v402 = vsel %vm400, 0, %v401
        %403 = vst [vmem:[#allocation2 + $0x4] sm:$0x1] %v402
        %v404 = vld [vmem:[#allocation2 + $0xc] sm:$0x1]
        %v405 = vsel %vm400, 0, %v404
        %406 = vst [vmem:[#allocation2 + $0xc] sm:$0x1] %v405
        %v407 = vld [vmem:[#allocation2 + $0x14] sm:$0x1]
        %v408 = vsel %vm400, 0, %v407
        %409 = vst [vmem:[#allocation2 + $0x14] sm:$0x1] %v408
        %v410 = vld [vmem:[#allocation2 + $0x1c] sm:$0x1]
        %v411 = vsel %vm400, 0, %v410
        %412 = vst [vmem:[#allocation2 + $0x1c] sm:$0x1] %v411
        %v413 = vld [vmem:[#allocation2 + $0x24] sm:$0x1]
        %v414 = vsel %vm400, 0, %v413
        %415 = vst [vmem:[#allocation2 + $0x24] sm:$0x1] %v414
        %v416 = vld [vmem:[#allocation2 + $0x2c] sm:$0x1]
        %v417 = vsel %vm400, 0, %v416
        %418 = vst [vmem:[#allocation2 + $0x2c] sm:$0x1] %v417
        %v419 = vld [vmem:[#allocation2 + $0x34] sm:$0x1]
        %v420 = vsel %vm400, 0, %v419
        %421 = vst [vmem:[#allocation2 + $0x34] sm:$0x1] %v420
        %v422 = vld [vmem:[#allocation2 + $0x3c] sm:$0x1]
        %v423 = vsel %vm400, 0, %v422
        %424 = vst [vmem:[#allocation2 + $0x3c] sm:$0x1] %v423
        %v425 = vld [vmem:[#allocation2 + $0x44] sm:$0x1]
        %v426 = vsel %vm400, 0, %v425
        %427 = vst [vmem:[#allocation2 + $0x44] sm:$0x1] %v426
        %v428 = vld [vmem:[#allocation2 + $0x4c] sm:$0x1]
        %v429 = vsel %vm400, 0, %v428
        %430 = vst [vmem:[#allocation2 + $0x4c] sm:$0x1] %v429
        %v431 = vld [vmem:[%s357] sm:$0xf]
        %v432 = vld [vmem:[%s357 + $0x10] sm:$0xf]
        %v433 = vld [vmem:[%s357 + $0x20] sm:$0xf]
        %v434 = vld [vmem:[%s357 + $0x30] sm:$0xf]
        %v435 = vld [vmem:[%s357 + $0x40] sm:$0xf]
        %v436 = vld [vmem:[%s357 + $0x50] sm:$0xf]
        %v437 = vld [vmem:[%s357 + $0x60] sm:$0xf]
        %v438 = vld [vmem:[%s357 + $0x70] sm:$0xf]
        %v439 = vld [vmem:[%s1] sm:$0xf]
        %v440 = vld [vmem:[%s357 + $0x4] sm:$0x1]
        %v441 = vld [vmem:[%s357 + $0x14] sm:$0x1]
        %v442 = vld [vmem:[%s357 + $0x24] sm:$0x1]
        %v443 = vld [vmem:[%s357 + $0x34] sm:$0x1]
        %v444 = vld [vmem:[%s357 + $0x44] sm:$0x1]
        %v445 = vld [vmem:[%s357 + $0x54] sm:$0x1]
        %v446 = vld [vmem:[%s357 + $0x64] sm:$0x1]
        %v447 = vld [vmem:[%s357 + $0x74] sm:$0x1]
        %vm448 = vsmask.f32 3328
        %vm449 = vsmask.f32 7440
        %vm450 = vmor %vm448, %vm449
        %v452 = vshrl.u32 %v431, 16
        %v454 = vrot.slane %v452, 4
        %v455 = vshll.u32 %v431, 16
        %v457 = vrot.slane %v455, 5
        %v458 = vor.u32 %v454, %v457
        %v459 = vrot.slane %v458, 4
        %v461 = vshll.u32 %v440, 16
        %v463 = vrot.slane %v461, 5
        %v464 = vsel %vm450, %v459, %v463
        %v466 = vshrl.u32 %v432, 16
        %v468 = vrot.slane %v466, 4
        %v469 = vshll.u32 %v432, 16
        %v471 = vrot.slane %v469, 5
        %v472 = vor.u32 %v468, %v471
        %v473 = vrot.slane %v472, 4
        %v475 = vshll.u32 %v441, 16
        %v477 = vrot.slane %v475, 5
        %v478 = vsel %vm450, %v473, %v477
        %v480 = vshrl.u32 %v433, 16
        %v482 = vrot.slane %v480, 4
        %v483 = vshll.u32 %v433, 16
        %v485 = vrot.slane %v483, 5
        %v486 = vor.u32 %v482, %v485
        %v487 = vrot.slane %v486, 4
        %v489 = vshll.u32 %v442, 16
        %v491 = vrot.slane %v489, 5
        %v492 = vsel %vm450, %v487, %v491
        %v494 = vshrl.u32 %v434, 16
        %v496 = vrot.slane %v494, 4
        %v497 = vshll.u32 %v434, 16
        %v499 = vrot.slane %v497, 5
        %v500 = vor.u32 %v496, %v499
        %v501 = vrot.slane %v500, 4
        %v503 = vshll.u32 %v443, 16
        %v505 = vrot.slane %v503, 5
        %v506 = vsel %vm450, %v501, %v505
        %v508 = vshrl.u32 %v435, 16
        %v510 = vrot.slane %v508, 4
        %v511 = vshll.u32 %v435, 16
        %v513 = vrot.slane %v511, 5
        %v514 = vor.u32 %v510, %v513
        %v515 = vrot.slane %v514, 4
        %v517 = vshll.u32 %v444, 16
        %v519 = vrot.slane %v517, 5
        %v520 = vsel %vm450, %v515, %v519
        %v522 = vshrl.u32 %v436, 16
        %v524 = vrot.slane %v522, 4
        %v525 = vshll.u32 %v436, 16
        %v527 = vrot.slane %v525, 5
        %v528 = vor.u32 %v524, %v527
        %v529 = vrot.slane %v528, 4
        %v531 = vshll.u32 %v445, 16
        %v533 = vrot.slane %v531, 5
        %v534 = vsel %vm450, %v529, %v533
        %v536 = vshrl.u32 %v437, 16
        %v538 = vrot.slane %v536, 4
        %v539 = vshll.u32 %v437, 16
        %v541 = vrot.slane %v539, 5
        %v542 = vor.u32 %v538, %v541
        %v543 = vrot.slane %v542, 4
        %v545 = vshll.u32 %v446, 16
        %v547 = vrot.slane %v545, 5
        %v548 = vsel %vm450, %v543, %v547
        %v550 = vshrl.u32 %v438, 16
        %v552 = vrot.slane %v550, 4
        %v553 = vshll.u32 %v438, 16
        %v555 = vrot.slane %v553, 5
        %v556 = vor.u32 %v552, %v555
        %v557 = vrot.slane %v556, 4
        %v559 = vshll.u32 %v447, 16
        %v561 = vrot.slane %v559, 5
        %v562 = vsel %vm450, %v557, %v561
        %s563 = scalar_lea.vmem %s1, 4
        %v564 = vld [vmem:[%s563] sm:$0xf]
        %v565 = vunpack.c.l.b16 %v464
        %v566 = vunpack.c.l.b16 %v478
        %v567 = vunpack.c.l.b16 %v492
        %v568 = vunpack.c.l.b16 %v506
        %v569 = vunpack.c.l.b16 %v520
        %v570 = vunpack.c.l.b16 %v534
        %v571 = vunpack.c.l.b16 %v548
        %v572 = vunpack.c.l.b16 %v562
        %v573 = vpack.c.b16 %v566, %v565
        %v574 = vpack.c.b16 %v568, %v567
        %v575 = vpack.c.b16 %v570, %v569
        %v576 = vpack.c.b16 %v572, %v571
        %vm577 = vcmask 64512
        %v579 = vsel %vm577, %v573, 0
        %v582 = vsel %vm577, %v574, 0
        %v585 = vsel %vm577, %v575, 0
        %v588 = vsel %vm577, %v576, 0
        %vm590 = vcmask 1043456
        %v592 = vsel %vm590, %v564, 0
        %594 = vmatpush.bf16.msra.mxu0 0
        %595 = vmatpush.bf16.msra.mxu0 0
        %596 = vmatpush.bf16.msra.mxu0 0
        %597 = vmatpush.bf16.msra.mxu0 0
        %598 = vmatpush.bf16.msra.mxu0 0
        %599 = vmatpush.bf16.msra.mxu0 0
        %600 = vmatpush.bf16.msra.mxu0 0
        %601 = vmatpush.bf16.msra.mxu0 %v592
        %602 = vmatmul.bf16.gmra.mxu0 %v579
        %v603 = vpop.f32.mrf.mxu0
        %v604 = vadd.f32 0.0, %v603
        %v605 = vpop.f32.mrf.mxu0
        %v606 = vadd.f32 0.0, %v605
        %607 = vmatmul.bf16.gmra.mxu0 %v582
        %v608 = vpop.f32.mrf.mxu0
        %v609 = vadd.f32 0.0, %v608
        %v610 = vpop.f32.mrf.mxu0
        %v611 = vadd.f32 0.0, %v610
        %612 = vmatmul.bf16.gmra.mxu0 %v585
        %v613 = vpop.f32.mrf.mxu0
        %v614 = vadd.f32 0.0, %v613
        %v615 = vpop.f32.mrf.mxu0
        %v616 = vadd.f32 0.0, %v615
        %617 = vmatmul.bf16.gmra.mxu0 %v588
        %v618 = vpop.f32.mrf.mxu0
        %v619 = vadd.f32 0.0, %v618
        %v620 = vpop.f32.mrf.mxu0
        %v621 = vadd.f32 0.0, %v620
        %622 = vdwg.mxu0
        %v631 = vunpack.c.l.b16 %v431
        %v632 = vunpack.c.l.b16 %v432
        %v633 = vunpack.c.l.b16 %v433
        %v634 = vunpack.c.l.b16 %v434
        %v635 = vunpack.c.l.b16 %v435
        %v636 = vunpack.c.l.b16 %v436
        %v637 = vunpack.c.l.b16 %v437
        %v638 = vunpack.c.l.b16 %v438
        %v639 = vpack.c.b16 %v632, %v631
        %v640 = vpack.c.b16 %v634, %v633
        %v641 = vpack.c.b16 %v636, %v635
        %v642 = vpack.c.b16 %v638, %v637
        %v644 = vsel %vm577, %v639, 0
        %v647 = vsel %vm577, %v640, 0
        %v650 = vsel %vm577, %v641, 0
        %v653 = vsel %vm577, %v642, 0
        %v656 = vsel %vm590, %v439, 0
        %658 = vmatpush.bf16.msra.mxu0 0
        %659 = vmatpush.bf16.msra.mxu0 0
        %660 = vmatpush.bf16.msra.mxu0 0
        %661 = vmatpush.bf16.msra.mxu0 0
        %662 = vmatpush.bf16.msra.mxu0 0
        %663 = vmatpush.bf16.msra.mxu0 0
        %664 = vmatpush.bf16.msra.mxu0 0
        %665 = vmatpush.bf16.msra.mxu0 %v656
        %666 = vmatmul.bf16.gmra.mxu0 %v644
        %v667 = vpop.f32.mrf.mxu0
        %v668 = vadd.f32 %v604, %v667
        %v669 = vpop.f32.mrf.mxu0
        %v670 = vadd.f32 %v606, %v669
        %671 = vmatmul.bf16.gmra.mxu0 %v647
        %v672 = vpop.f32.mrf.mxu0
        %v673 = vadd.f32 %v609, %v672
        %v674 = vpop.f32.mrf.mxu0
        %v675 = vadd.f32 %v611, %v674
        %676 = vmatmul.bf16.gmra.mxu0 %v650
        %v677 = vpop.f32.mrf.mxu0
        %v678 = vadd.f32 %v614, %v677
        %v679 = vpop.f32.mrf.mxu0
        %v680 = vadd.f32 %v616, %v679
        %681 = vmatmul.bf16.gmra.mxu0 %v653
        %v682 = vpop.f32.mrf.mxu0
        %v683 = vadd.f32 %v619, %v682
        %v684 = vpop.f32.mrf.mxu0
        %v685 = vadd.f32 %v621, %v684
        %686 = vdwg.mxu0
        %s687 = scalar_lea.vmem %s357, 8
        %v688 = vld [vmem:[%s687] sm:$0xf]
        %v689 = vld [vmem:[%s687 + $0x10] sm:$0xf]
        %v690 = vld [vmem:[%s687 + $0x20] sm:$0xf]
        %v691 = vld [vmem:[%s687 + $0x30] sm:$0xf]
        %v692 = vld [vmem:[%s687 + $0x40] sm:$0xf]
        %v693 = vld [vmem:[%s687 + $0x50] sm:$0xf]
        %v694 = vld [vmem:[%s687 + $0x60] sm:$0xf]
        %v695 = vld [vmem:[%s687 + $0x70] sm:$0xf]
        %s696 = scalar_lea.vmem %s1, 8
        %v697 = vld [vmem:[%s696] sm:$0xf]
        %v706 = vunpack.c.l.b16 %v688
        %v707 = vunpack.c.l.b16 %v689
        %v708 = vunpack.c.l.b16 %v690
        %v709 = vunpack.c.l.b16 %v691
        %v710 = vunpack.c.l.b16 %v692
        %v711 = vunpack.c.l.b16 %v693
        %v712 = vunpack.c.l.b16 %v694
        %v713 = vunpack.c.l.b16 %v695
        %v714 = vpack.c.b16 %v707, %v706
        %v715 = vpack.c.b16 %v709, %v708
        %v716 = vpack.c.b16 %v711, %v710
        %v717 = vpack.c.b16 %v713, %v712
        %v719 = vsel %vm577, %v714, 0
        %v722 = vsel %vm577, %v715, 0
        %v725 = vsel %vm577, %v716, 0
        %v728 = vsel %vm577, %v717, 0
        %v731 = vsel %vm590, %v697, 0
        %733 = vmatpush.bf16.msra.mxu0 0
        %734 = vmatpush.bf16.msra.mxu0 0
        %735 = vmatpush.bf16.msra.mxu0 0
        %736 = vmatpush.bf16.msra.mxu0 0
        %737 = vmatpush.bf16.msra.mxu0 0
        %738 = vmatpush.bf16.msra.mxu0 0
        %739 = vmatpush.bf16.msra.mxu0 0
        %740 = vmatpush.bf16.msra.mxu0 %v731
        %741 = vmatmul.bf16.gmra.mxu0 %v719
        %v742 = vpop.f32.mrf.mxu0
        %v743 = vadd.f32 0.0, %v742
        %v744 = vpop.f32.mrf.mxu0
        %v745 = vadd.f32 0.0, %v744
        %746 = vmatmul.bf16.gmra.mxu0 %v722
        %v747 = vpop.f32.mrf.mxu0
        %v748 = vadd.f32 0.0, %v747
        %v749 = vpop.f32.mrf.mxu0
        %v750 = vadd.f32 0.0, %v749
        %751 = vmatmul.bf16.gmra.mxu0 %v725
        %v752 = vpop.f32.mrf.mxu0
        %v753 = vadd.f32 0.0, %v752
        %v754 = vpop.f32.mrf.mxu0
        %v755 = vadd.f32 0.0, %v754
        %756 = vmatmul.bf16.gmra.mxu0 %v728
        %v757 = vpop.f32.mrf.mxu0
        %v758 = vadd.f32 0.0, %v757
        %v759 = vpop.f32.mrf.mxu0
        %v760 = vadd.f32 0.0, %v759
        %761 = vdwg.mxu0
        %v762 = vadd.f32 %v668, %v743
        %v763 = vadd.f32 %v670, %v745
        %v764 = vadd.f32 %v673, %v748
        %v765 = vadd.f32 %v675, %v750
        %v766 = vadd.f32 %v678, %v753
        %v767 = vadd.f32 %v680, %v755
        %v768 = vadd.f32 %v683, %v758
        %v769 = vadd.f32 %v685, %v760
        %v770 = vld [vmem:[%s687] sm:$0xf]
        %v771 = vld [vmem:[%s687 + $0x4] sm:$0x1]
        %v772 = vld [vmem:[%s687 + $0x10] sm:$0xf]
        %v773 = vld [vmem:[%s687 + $0x14] sm:$0x1]
        %v774 = vld [vmem:[%s687 + $0x20] sm:$0xf]
        %v775 = vld [vmem:[%s687 + $0x24] sm:$0x1]
        %v776 = vld [vmem:[%s687 + $0x30] sm:$0xf]
        %v777 = vld [vmem:[%s687 + $0x34] sm:$0x1]
        %v778 = vld [vmem:[%s687 + $0x40] sm:$0xf]
        %v779 = vld [vmem:[%s687 + $0x44] sm:$0x1]
        %v780 = vld [vmem:[%s687 + $0x50] sm:$0xf]
        %v781 = vld [vmem:[%s687 + $0x54] sm:$0x1]
        %v782 = vld [vmem:[%s687 + $0x60] sm:$0xf]
        %v783 = vld [vmem:[%s687 + $0x64] sm:$0x1]
        %v784 = vld [vmem:[%s687 + $0x70] sm:$0xf]
        %v785 = vld [vmem:[%s687 + $0x74] sm:$0x1]
        %v787 = vshrl.u32 %v770, 16
        %v789 = vrot.slane %v787, 4
        %v790 = vshll.u32 %v770, 16
        %v792 = vrot.slane %v790, 5
        %v793 = vor.u32 %v789, %v792
        %v794 = vrot.slane %v793, 4
        %v796 = vshll.u32 %v771, 16
        %v798 = vrot.slane %v796, 5
        %v799 = vsel %vm450, %v794, %v798
        %v801 = vshrl.u32 %v772, 16
        %v803 = vrot.slane %v801, 4
        %v804 = vshll.u32 %v772, 16
        %v806 = vrot.slane %v804, 5
        %v807 = vor.u32 %v803, %v806
        %v808 = vrot.slane %v807, 4
        %v810 = vshll.u32 %v773, 16
        %v812 = vrot.slane %v810, 5
        %v813 = vsel %vm450, %v808, %v812
        %v815 = vshrl.u32 %v774, 16
        %v817 = vrot.slane %v815, 4
        %v818 = vshll.u32 %v774, 16
        %v820 = vrot.slane %v818, 5
        %v821 = vor.u32 %v817, %v820
        %v822 = vrot.slane %v821, 4
        %v824 = vshll.u32 %v775, 16
        %v826 = vrot.slane %v824, 5
        %v827 = vsel %vm450, %v822, %v826
        %v829 = vshrl.u32 %v776, 16
        %v831 = vrot.slane %v829, 4
        %v832 = vshll.u32 %v776, 16
        %v834 = vrot.slane %v832, 5
        %v835 = vor.u32 %v831, %v834
        %v836 = vrot.slane %v835, 4
        %v838 = vshll.u32 %v777, 16
        %v840 = vrot.slane %v838, 5
        %v841 = vsel %vm450, %v836, %v840
        %v843 = vshrl.u32 %v778, 16
        %v845 = vrot.slane %v843, 4
        %v846 = vshll.u32 %v778, 16
        %v848 = vrot.slane %v846, 5
        %v849 = vor.u32 %v845, %v848
        %v850 = vrot.slane %v849, 4
        %v852 = vshll.u32 %v779, 16
        %v854 = vrot.slane %v852, 5
        %v855 = vsel %vm450, %v850, %v854
        %v857 = vshrl.u32 %v780, 16
        %v859 = vrot.slane %v857, 4
        %v860 = vshll.u32 %v780, 16
        %v862 = vrot.slane %v860, 5
        %v863 = vor.u32 %v859, %v862
        %v864 = vrot.slane %v863, 4
        %v866 = vshll.u32 %v781, 16
        %v868 = vrot.slane %v866, 5
        %v869 = vsel %vm450, %v864, %v868
        %v871 = vshrl.u32 %v782, 16
        %v873 = vrot.slane %v871, 4
        %v874 = vshll.u32 %v782, 16
        %v876 = vrot.slane %v874, 5
        %v877 = vor.u32 %v873, %v876
        %v878 = vrot.slane %v877, 4
        %v880 = vshll.u32 %v783, 16
        %v882 = vrot.slane %v880, 5
        %v883 = vsel %vm450, %v878, %v882
        %v885 = vshrl.u32 %v784, 16
        %v887 = vrot.slane %v885, 4
        %v888 = vshll.u32 %v784, 16
        %v890 = vrot.slane %v888, 5
        %v891 = vor.u32 %v887, %v890
        %v892 = vrot.slane %v891, 4
        %v894 = vshll.u32 %v785, 16
        %v896 = vrot.slane %v894, 5
        %v897 = vsel %vm450, %v892, %v896
        %s898 = scalar_lea.vmem %s1, 12
        %v899 = vld [vmem:[%s898] sm:$0xf]
        %v900 = vunpack.c.l.b16 %v799
        %v901 = vunpack.c.l.b16 %v813
        %v902 = vunpack.c.l.b16 %v827
        %v903 = vunpack.c.l.b16 %v841
        %v904 = vunpack.c.l.b16 %v855
        %v905 = vunpack.c.l.b16 %v869
        %v906 = vunpack.c.l.b16 %v883
        %v907 = vunpack.c.l.b16 %v897
        %v908 = vpack.c.b16 %v901, %v900
        %v909 = vpack.c.b16 %v903, %v902
        %v910 = vpack.c.b16 %v905, %v904
        %v911 = vpack.c.b16 %v907, %v906
        %v913 = vsel %vm577, %v908, 0
        %v916 = vsel %vm577, %v909, 0
        %v919 = vsel %vm577, %v910, 0
        %v922 = vsel %vm577, %v911, 0
        %v925 = vsel %vm590, %v899, 0
        %927 = vmatpush.bf16.msra.mxu0 0
        %928 = vmatpush.bf16.msra.mxu0 0
        %929 = vmatpush.bf16.msra.mxu0 0
        %930 = vmatpush.bf16.msra.mxu0 0
        %931 = vmatpush.bf16.msra.mxu0 0
        %932 = vmatpush.bf16.msra.mxu0 0
        %933 = vmatpush.bf16.msra.mxu0 0
        %934 = vmatpush.bf16.msra.mxu0 %v925
        %935 = vmatmul.bf16.gmra.mxu0 %v913
        %v936 = vpop.f32.mrf.mxu0
        %v937 = vadd.f32 0.0, %v936
        %v938 = vpop.f32.mrf.mxu0
        %v939 = vadd.f32 0.0, %v938
        %940 = vmatmul.bf16.gmra.mxu0 %v916
        %v941 = vpop.f32.mrf.mxu0
        %v942 = vadd.f32 0.0, %v941
        %v943 = vpop.f32.mrf.mxu0
        %v944 = vadd.f32 0.0, %v943
        %945 = vmatmul.bf16.gmra.mxu0 %v919
        %v946 = vpop.f32.mrf.mxu0
        %v947 = vadd.f32 0.0, %v946
        %v948 = vpop.f32.mrf.mxu0
        %v949 = vadd.f32 0.0, %v948
        %950 = vmatmul.bf16.gmra.mxu0 %v922
        %v951 = vpop.f32.mrf.mxu0
        %v952 = vadd.f32 0.0, %v951
        %v953 = vpop.f32.mrf.mxu0
        %v954 = vadd.f32 0.0, %v953
        %955 = vdwg.mxu0
        %v956 = vadd.f32 %v762, %v937
        %v957 = vadd.f32 %v763, %v939
        %v958 = vadd.f32 %v764, %v942
        %v959 = vadd.f32 %v765, %v944
        %v960 = vadd.f32 %v766, %v947
        %v961 = vadd.f32 %v767, %v949
        %v962 = vadd.f32 %v768, %v952
        %v963 = vadd.f32 %v769, %v954
        %s964 = scalar_lea.vmem %s357, 16
        %v965 = vld [vmem:[%s964] sm:$0xf]
        %v966 = vld [vmem:[%s964 + $0x10] sm:$0xf]
        %v967 = vld [vmem:[%s964 + $0x20] sm:$0xf]
        %v968 = vld [vmem:[%s964 + $0x30] sm:$0xf]
        %v969 = vld [vmem:[%s964 + $0x40] sm:$0xf]
        %v970 = vld [vmem:[%s964 + $0x50] sm:$0xf]
        %v971 = vld [vmem:[%s964 + $0x60] sm:$0xf]
        %v972 = vld [vmem:[%s964 + $0x70] sm:$0xf]
        %s973 = scalar_lea.vmem %s1, 16
        %v974 = vld [vmem:[%s973] sm:$0xf]
        %v983 = vunpack.c.l.b16 %v965
        %v984 = vunpack.c.l.b16 %v966
        %v985 = vunpack.c.l.b16 %v967
        %v986 = vunpack.c.l.b16 %v968
        %v987 = vunpack.c.l.b16 %v969
        %v988 = vunpack.c.l.b16 %v970
        %v989 = vunpack.c.l.b16 %v971
        %v990 = vunpack.c.l.b16 %v972
        %v991 = vpack.c.b16 %v984, %v983
        %v992 = vpack.c.b16 %v986, %v985
        %v993 = vpack.c.b16 %v988, %v987
        %v994 = vpack.c.b16 %v990, %v989
        %v996 = vsel %vm577, %v991, 0
        %v999 = vsel %vm577, %v992, 0
        %v1002 = vsel %vm577, %v993, 0
        %v1005 = vsel %vm577, %v994, 0
        %v1008 = vsel %vm590, %v974, 0
        %1010 = vmatpush.bf16.msra.mxu0 0
        %1011 = vmatpush.bf16.msra.mxu0 0
        %1012 = vmatpush.bf16.msra.mxu0 0
        %1013 = vmatpush.bf16.msra.mxu0 0
        %1014 = vmatpush.bf16.msra.mxu0 0
        %1015 = vmatpush.bf16.msra.mxu0 0
        %1016 = vmatpush.bf16.msra.mxu0 0
        %1017 = vmatpush.bf16.msra.mxu0 %v1008
        %1018 = vmatmul.bf16.gmra.mxu0 %v996
        %v1019 = vpop.f32.mrf.mxu0
        %v1020 = vadd.f32 0.0, %v1019
        %v1021 = vpop.f32.mrf.mxu0
        %v1022 = vadd.f32 0.0, %v1021
        %1023 = vmatmul.bf16.gmra.mxu0 %v999
        %v1024 = vpop.f32.mrf.mxu0
        %v1025 = vadd.f32 0.0, %v1024
        %v1026 = vpop.f32.mrf.mxu0
        %v1027 = vadd.f32 0.0, %v1026
        %1028 = vmatmul.bf16.gmra.mxu0 %v1002
        %v1029 = vpop.f32.mrf.mxu0
        %v1030 = vadd.f32 0.0, %v1029
        %v1031 = vpop.f32.mrf.mxu0
        %v1032 = vadd.f32 0.0, %v1031
        %1033 = vmatmul.bf16.gmra.mxu0 %v1005
        %v1034 = vpop.f32.mrf.mxu0
        %v1035 = vadd.f32 0.0, %v1034
        %v1036 = vpop.f32.mrf.mxu0
        %v1037 = vadd.f32 0.0, %v1036
        %1038 = vdwg.mxu0
        %v1039 = vadd.f32 %v956, %v1020
        %v1040 = vadd.f32 %v957, %v1022
        %v1041 = vadd.f32 %v958, %v1025
        %v1042 = vadd.f32 %v959, %v1027
        %v1043 = vadd.f32 %v960, %v1030
        %v1044 = vadd.f32 %v961, %v1032
        %v1045 = vadd.f32 %v962, %v1035
        %v1046 = vadd.f32 %v963, %v1037
        %v1047 = vld [vmem:[%s964] sm:$0xf]
        %v1048 = vld [vmem:[%s964 + $0x4] sm:$0x1]
        %v1049 = vld [vmem:[%s964 + $0x10] sm:$0xf]
        %v1050 = vld [vmem:[%s964 + $0x14] sm:$0x1]
        %v1051 = vld [vmem:[%s964 + $0x20] sm:$0xf]
        %v1052 = vld [vmem:[%s964 + $0x24] sm:$0x1]
        %v1053 = vld [vmem:[%s964 + $0x30] sm:$0xf]
        %v1054 = vld [vmem:[%s964 + $0x34] sm:$0x1]
        %v1055 = vld [vmem:[%s964 + $0x40] sm:$0xf]
        %v1056 = vld [vmem:[%s964 + $0x44] sm:$0x1]
        %v1057 = vld [vmem:[%s964 + $0x50] sm:$0xf]
        %v1058 = vld [vmem:[%s964 + $0x54] sm:$0x1]
        %v1059 = vld [vmem:[%s964 + $0x60] sm:$0xf]
        %v1060 = vld [vmem:[%s964 + $0x64] sm:$0x1]
        %v1061 = vld [vmem:[%s964 + $0x70] sm:$0xf]
        %v1062 = vld [vmem:[%s964 + $0x74] sm:$0x1]
        %v1064 = vshrl.u32 %v1047, 16
        %v1066 = vrot.slane %v1064, 4
        %v1067 = vshll.u32 %v1047, 16
        %v1069 = vrot.slane %v1067, 5
        %v1070 = vor.u32 %v1066, %v1069
        %v1071 = vrot.slane %v1070, 4
        %v1073 = vshll.u32 %v1048, 16
        %v1075 = vrot.slane %v1073, 5
        %v1076 = vsel %vm450, %v1071, %v1075
        %v1078 = vshrl.u32 %v1049, 16
        %v1080 = vrot.slane %v1078, 4
        %v1081 = vshll.u32 %v1049, 16
        %v1083 = vrot.slane %v1081, 5
        %v1084 = vor.u32 %v1080, %v1083
        %v1085 = vrot.slane %v1084, 4
        %v1087 = vshll.u32 %v1050, 16
        %v1089 = vrot.slane %v1087, 5
        %v1090 = vsel %vm450, %v1085, %v1089
        %v1092 = vshrl.u32 %v1051, 16
        %v1094 = vrot.slane %v1092, 4
        %v1095 = vshll.u32 %v1051, 16
        %v1097 = vrot.slane %v1095, 5
        %v1098 = vor.u32 %v1094, %v1097
        %v1099 = vrot.slane %v1098, 4
        %v1101 = vshll.u32 %v1052, 16
        %v1103 = vrot.slane %v1101, 5
        %v1104 = vsel %vm450, %v1099, %v1103
        %v1106 = vshrl.u32 %v1053, 16
        %v1108 = vrot.slane %v1106, 4
        %v1109 = vshll.u32 %v1053, 16
        %v1111 = vrot.slane %v1109, 5
        %v1112 = vor.u32 %v1108, %v1111
        %v1113 = vrot.slane %v1112, 4
        %v1115 = vshll.u32 %v1054, 16
        %v1117 = vrot.slane %v1115, 5
        %v1118 = vsel %vm450, %v1113, %v1117
        %v1120 = vshrl.u32 %v1055, 16
        %v1122 = vrot.slane %v1120, 4
        %v1123 = vshll.u32 %v1055, 16
        %v1125 = vrot.slane %v1123, 5
        %v1126 = vor.u32 %v1122, %v1125
        %v1127 = vrot.slane %v1126, 4
        %v1129 = vshll.u32 %v1056, 16
        %v1131 = vrot.slane %v1129, 5
        %v1132 = vsel %vm450, %v1127, %v1131
        %v1134 = vshrl.u32 %v1057, 16
        %v1136 = vrot.slane %v1134, 4
        %v1137 = vshll.u32 %v1057, 16
        %v1139 = vrot.slane %v1137, 5
        %v1140 = vor.u32 %v1136, %v1139
        %v1141 = vrot.slane %v1140, 4
        %v1143 = vshll.u32 %v1058, 16
        %v1145 = vrot.slane %v1143, 5
        %v1146 = vsel %vm450, %v1141, %v1145
        %v1148 = vshrl.u32 %v1059, 16
        %v1150 = vrot.slane %v1148, 4
        %v1151 = vshll.u32 %v1059, 16
        %v1153 = vrot.slane %v1151, 5
        %v1154 = vor.u32 %v1150, %v1153
        %v1155 = vrot.slane %v1154, 4
        %v1157 = vshll.u32 %v1060, 16
        %v1159 = vrot.slane %v1157, 5
        %v1160 = vsel %vm450, %v1155, %v1159
        %v1162 = vshrl.u32 %v1061, 16
        %v1164 = vrot.slane %v1162, 4
        %v1165 = vshll.u32 %v1061, 16
        %v1167 = vrot.slane %v1165, 5
        %v1168 = vor.u32 %v1164, %v1167
        %v1169 = vrot.slane %v1168, 4
        %v1171 = vshll.u32 %v1062, 16
        %v1173 = vrot.slane %v1171, 5
        %v1174 = vsel %vm450, %v1169, %v1173
        %s1175 = scalar_lea.vmem %s1, 20
        %v1176 = vld [vmem:[%s1175] sm:$0xf]
        %v1177 = vunpack.c.l.b16 %v1076
        %v1178 = vunpack.c.l.b16 %v1090
        %v1179 = vunpack.c.l.b16 %v1104
        %v1180 = vunpack.c.l.b16 %v1118
        %v1181 = vunpack.c.l.b16 %v1132
        %v1182 = vunpack.c.l.b16 %v1146
        %v1183 = vunpack.c.l.b16 %v1160
        %v1184 = vunpack.c.l.b16 %v1174
        %v1185 = vpack.c.b16 %v1178, %v1177
        %v1186 = vpack.c.b16 %v1180, %v1179
        %v1187 = vpack.c.b16 %v1182, %v1181
        %v1188 = vpack.c.b16 %v1184, %v1183
        %v1190 = vsel %vm577, %v1185, 0
        %v1193 = vsel %vm577, %v1186, 0
        %v1196 = vsel %vm577, %v1187, 0
        %v1199 = vsel %vm577, %v1188, 0
        %v1202 = vsel %vm590, %v1176, 0
        %1204 = vmatpush.bf16.msra.mxu0 0
        %1205 = vmatpush.bf16.msra.mxu0 0
        %1206 = vmatpush.bf16.msra.mxu0 0
        %1207 = vmatpush.bf16.msra.mxu0 0
        %1208 = vmatpush.bf16.msra.mxu0 0
        %1209 = vmatpush.bf16.msra.mxu0 0
        %1210 = vmatpush.bf16.msra.mxu0 0
        %1211 = vmatpush.bf16.msra.mxu0 %v1202
        %1212 = vmatmul.bf16.gmra.mxu0 %v1190
        %v1213 = vpop.f32.mrf.mxu0
        %v1214 = vadd.f32 0.0, %v1213
        %v1215 = vpop.f32.mrf.mxu0
        %v1216 = vadd.f32 0.0, %v1215
        %1217 = vmatmul.bf16.gmra.mxu0 %v1193
        %v1218 = vpop.f32.mrf.mxu0
        %v1219 = vadd.f32 0.0, %v1218
        %v1220 = vpop.f32.mrf.mxu0
        %v1221 = vadd.f32 0.0, %v1220
        %1222 = vmatmul.bf16.gmra.mxu0 %v1196
        %v1223 = vpop.f32.mrf.mxu0
        %v1224 = vadd.f32 0.0, %v1223
        %v1225 = vpop.f32.mrf.mxu0
        %v1226 = vadd.f32 0.0, %v1225
        %1227 = vmatmul.bf16.gmra.mxu0 %v1199
        %v1228 = vpop.f32.mrf.mxu0
        %v1229 = vadd.f32 0.0, %v1228
        %v1230 = vpop.f32.mrf.mxu0
        %v1231 = vadd.f32 0.0, %v1230
        %1232 = vdwg.mxu0
        %v1233 = vadd.f32 %v1039, %v1214
        %v1234 = vadd.f32 %v1040, %v1216
        %v1235 = vadd.f32 %v1041, %v1219
        %v1236 = vadd.f32 %v1042, %v1221
        %v1237 = vadd.f32 %v1043, %v1224
        %v1238 = vadd.f32 %v1044, %v1226
        %v1239 = vadd.f32 %v1045, %v1229
        %v1240 = vadd.f32 %v1046, %v1231
        %v1241 = vld [vmem:[%s2] sm:$0x1]
        %v1243 = vperm.slane %v1241, 0
        %v1245 = vmul.f32 %v1233, %v1243
        %v1246 = vmul.f32 %v1234, %v1243
        %v1247 = vmul.f32 %v1235, %v1243
        %v1248 = vmul.f32 %v1236, %v1243
        %v1249 = vmul.f32 %v1237, %v1243
        %v1250 = vmul.f32 %v1238, %v1243
        %v1251 = vmul.f32 %v1239, %v1243
        %v1252 = vmul.f32 %v1240, %v1243
        %v1253 = vld [vmem:[%s3] sm:$0x1]
        %v1255 = vperm.slane %v1253, 0
        %v1257 = vadd.f32 %v1245, %v1255
        %v1258 = vadd.f32 %v1246, %v1255
        %v1259 = vadd.f32 %v1247, %v1255
        %v1260 = vadd.f32 %v1248, %v1255
        %v1261 = vadd.f32 %v1249, %v1255
        %v1262 = vadd.f32 %v1250, %v1255
        %v1263 = vadd.f32 %v1251, %v1255
        %v1264 = vadd.f32 %v1252, %v1255
        %v1265 = vmax.f32 %v1257, 0.0
        %v1266 = vmax.f32 %v1258, 0.0
        %v1267 = vmax.f32 %v1259, 0.0
        %v1268 = vmax.f32 %v1260, 0.0
        %v1269 = vmax.f32 %v1261, 0.0
        %v1270 = vmax.f32 %v1262, 0.0
        %v1271 = vmax.f32 %v1263, 0.0
        %v1272 = vmax.f32 %v1264, 0.0
        %v1273 = vpack.c.bf16 %v1265, %v1265
        %v1274 = vpack.c.bf16 %v1266, %v1266
        %v1275 = vpack.c.bf16 %v1267, %v1267
        %v1276 = vpack.c.bf16 %v1268, %v1268
        %v1277 = vpack.c.bf16 %v1269, %v1269
        %v1278 = vpack.c.bf16 %v1270, %v1270
        %v1279 = vpack.c.bf16 %v1271, %v1271
        %v1280 = vpack.c.bf16 %v1272, %v1272
        %v1282 = vshrl.u32 %v1273, 16
        %v1284 = vrot.slane %v1282, 7
        %v1285 = vshll.u32 %v1273, 16
        %v1287 = vor.u32 %v1284, %v1285
        %v1288 = vrot.slane %v1284, 4
        %v1290 = vshrl.u32 %v1274, 16
        %v1292 = vrot.slane %v1290, 7
        %v1293 = vshll.u32 %v1274, 16
        %v1295 = vor.u32 %v1292, %v1293
        %v1296 = vrot.slane %v1292, 4
        %v1298 = vshrl.u32 %v1275, 16
        %v1300 = vrot.slane %v1298, 7
        %v1301 = vshll.u32 %v1275, 16
        %v1303 = vor.u32 %v1300, %v1301
        %v1304 = vrot.slane %v1300, 4
        %v1306 = vshrl.u32 %v1276, 16
        %v1308 = vrot.slane %v1306, 7
        %v1309 = vshll.u32 %v1276, 16
        %v1311 = vor.u32 %v1308, %v1309
        %v1312 = vrot.slane %v1308, 4
        %v1314 = vshrl.u32 %v1277, 16
        %v1316 = vrot.slane %v1314, 7
        %v1317 = vshll.u32 %v1277, 16
        %v1319 = vor.u32 %v1316, %v1317
        %v1320 = vrot.slane %v1316, 4
        %v1322 = vshrl.u32 %v1278, 16
        %v1324 = vrot.slane %v1322, 7
        %v1325 = vshll.u32 %v1278, 16
        %v1327 = vor.u32 %v1324, %v1325
        %v1328 = vrot.slane %v1324, 4
        %v1330 = vshrl.u32 %v1279, 16
        %v1332 = vrot.slane %v1330, 7
        %v1333 = vshll.u32 %v1279, 16
        %v1335 = vor.u32 %v1332, %v1333
        %v1336 = vrot.slane %v1332, 4
        %v1338 = vshrl.u32 %v1280, 16
        %v1340 = vrot.slane %v1338, 7
        %v1341 = vshll.u32 %v1280, 16
        %v1343 = vor.u32 %v1340, %v1341
        %v1344 = vrot.slane %v1340, 4
        %s1361 = scalar_lea.vmem [#allocation2], 8
        %vm1362 = vcmask 60416
        %vm1363 = vmand %vm1362, %vm399
        %v1364 = vld [vmem:[%s1361] sm:$0xf]
        %v1365 = vsel %vm1363, %v1287, %v1364
        %1366 = vst [vmem:[%s1361] sm:$0xf] %v1365
        %v1367 = vld [vmem:[%s1361 + $0x4] sm:$0x1]
        %v1368 = vsel %vm368, %v1288, %v1367
        %1369 = vst [vmem:[%s1361 + $0x4] sm:$0x1] %v1368
        %v1370 = vld [vmem:[%s1361 + $0x8] sm:$0xf]
        %v1371 = vsel %vm1363, %v1295, %v1370
        %1372 = vst [vmem:[%s1361 + $0x8] sm:$0xf] %v1371
        %v1373 = vld [vmem:[%s1361 + $0xc] sm:$0x1]
        %v1374 = vsel %vm368, %v1296, %v1373
        %1375 = vst [vmem:[%s1361 + $0xc] sm:$0x1] %v1374
        %v1376 = vld [vmem:[%s1361 + $0x10] sm:$0xf]
        %v1377 = vsel %vm1363, %v1303, %v1376
        %1378 = vst [vmem:[%s1361 + $0x10] sm:$0xf] %v1377
        %v1379 = vld [vmem:[%s1361 + $0x14] sm:$0x1]
        %v1380 = vsel %vm368, %v1304, %v1379
        %1381 = vst [vmem:[%s1361 + $0x14] sm:$0x1] %v1380
        %v1382 = vld [vmem:[%s1361 + $0x18] sm:$0xf]
        %v1383 = vsel %vm1363, %v1311, %v1382
        %1384 = vst [vmem:[%s1361 + $0x18] sm:$0xf] %v1383
        %v1385 = vld [vmem:[%s1361 + $0x1c] sm:$0x1]
        %v1386 = vsel %vm368, %v1312, %v1385
        %1387 = vst [vmem:[%s1361 + $0x1c] sm:$0x1] %v1386
        %v1388 = vld [vmem:[%s1361 + $0x20] sm:$0xf]
        %v1389 = vsel %vm1363, %v1319, %v1388
        %1390 = vst [vmem:[%s1361 + $0x20] sm:$0xf] %v1389
        %v1391 = vld [vmem:[%s1361 + $0x24] sm:$0x1]
        %v1392 = vsel %vm368, %v1320, %v1391
        %1393 = vst [vmem:[%s1361 + $0x24] sm:$0x1] %v1392
        %v1394 = vld [vmem:[%s1361 + $0x28] sm:$0xf]
        %v1395 = vsel %vm1363, %v1327, %v1394
        %1396 = vst [vmem:[%s1361 + $0x28] sm:$0xf] %v1395
        %v1397 = vld [vmem:[%s1361 + $0x2c] sm:$0x1]
        %v1398 = vsel %vm368, %v1328, %v1397
        %1399 = vst [vmem:[%s1361 + $0x2c] sm:$0x1] %v1398
        %v1400 = vld [vmem:[%s1361 + $0x30] sm:$0xf]
        %v1401 = vsel %vm1363, %v1335, %v1400
        %1402 = vst [vmem:[%s1361 + $0x30] sm:$0xf] %v1401
        %v1403 = vld [vmem:[%s1361 + $0x34] sm:$0x1]
        %v1404 = vsel %vm368, %v1336, %v1403
        %1405 = vst [vmem:[%s1361 + $0x34] sm:$0x1] %v1404
        %v1406 = vld [vmem:[%s1361 + $0x38] sm:$0xf]
        %v1407 = vsel %vm1363, %v1343, %v1406
        %1408 = vst [vmem:[%s1361 + $0x38] sm:$0xf] %v1407
        %v1409 = vld [vmem:[%s1361 + $0x3c] sm:$0x1]
        %v1410 = vsel %vm368, %v1344, %v1409
        %1411 = vst [vmem:[%s1361 + $0x3c] sm:$0x1] %v1410
        %v1412 = vld [vmem:[#allocation2] sm:$0xf]
        %v1413 = vld [vmem:[#allocation2 + $0x8] sm:$0xf]
        %v1414 = vld [vmem:[#allocation2 + $0x10] sm:$0xf]
        %v1415 = vld [vmem:[#allocation2 + $0x18] sm:$0xf]
        %v1416 = vld [vmem:[#allocation2 + $0x20] sm:$0xf]
        %v1417 = vld [vmem:[#allocation2 + $0x28] sm:$0xf]
        %v1418 = vld [vmem:[#allocation2 + $0x30] sm:$0xf]
        %v1419 = vld [vmem:[#allocation2 + $0x38] sm:$0xf]
        %v1420 = vld [vmem:[%s4] sm:$0xf]
        %v1421 = vld [vmem:[#allocation2 + $0x4] sm:$0x1]
        %v1422 = vld [vmem:[#allocation2 + $0xc] sm:$0x1]
        %v1423 = vld [vmem:[#allocation2 + $0x14] sm:$0x1]
        %v1424 = vld [vmem:[#allocation2 + $0x1c] sm:$0x1]
        %v1425 = vld [vmem:[#allocation2 + $0x24] sm:$0x1]
        %v1426 = vld [vmem:[#allocation2 + $0x2c] sm:$0x1]
        %v1427 = vld [vmem:[#allocation2 + $0x34] sm:$0x1]
        %v1428 = vld [vmem:[#allocation2 + $0x3c] sm:$0x1]
        %v1430 = vshrl.u32 %v1412, 16
        %v1432 = vrot.slane %v1430, 4
        %v1433 = vshll.u32 %v1412, 16
        %v1435 = vrot.slane %v1433, 5
        %v1436 = vor.u32 %v1432, %v1435
        %v1437 = vrot.slane %v1436, 4
        %v1439 = vshll.u32 %v1421, 16
        %v1441 = vrot.slane %v1439, 5
        %v1442 = vsel %vm450, %v1437, %v1441
        %v1444 = vshrl.u32 %v1413, 16
        %v1446 = vrot.slane %v1444, 4
        %v1447 = vshll.u32 %v1413, 16
        %v1449 = vrot.slane %v1447, 5
        %v1450 = vor.u32 %v1446, %v1449
        %v1451 = vrot.slane %v1450, 4
        %v1453 = vshll.u32 %v1422, 16
        %v1455 = vrot.slane %v1453, 5
        %v1456 = vsel %vm450, %v1451, %v1455
        %v1458 = vshrl.u32 %v1414, 16
        %v1460 = vrot.slane %v1458, 4
        %v1461 = vshll.u32 %v1414, 16
        %v1463 = vrot.slane %v1461, 5
        %v1464 = vor.u32 %v1460, %v1463
        %v1465 = vrot.slane %v1464, 4
        %v1467 = vshll.u32 %v1423, 16
        %v1469 = vrot.slane %v1467, 5
        %v1470 = vsel %vm450, %v1465, %v1469
        %v1472 = vshrl.u32 %v1415, 16
        %v1474 = vrot.slane %v1472, 4
        %v1475 = vshll.u32 %v1415, 16
        %v1477 = vrot.slane %v1475, 5
        %v1478 = vor.u32 %v1474, %v1477
        %v1479 = vrot.slane %v1478, 4
        %v1481 = vshll.u32 %v1424, 16
        %v1483 = vrot.slane %v1481, 5
        %v1484 = vsel %vm450, %v1479, %v1483
        %v1486 = vshrl.u32 %v1416, 16
        %v1488 = vrot.slane %v1486, 4
        %v1489 = vshll.u32 %v1416, 16
        %v1491 = vrot.slane %v1489, 5
        %v1492 = vor.u32 %v1488, %v1491
        %v1493 = vrot.slane %v1492, 4
        %v1495 = vshll.u32 %v1425, 16
        %v1497 = vrot.slane %v1495, 5
        %v1498 = vsel %vm450, %v1493, %v1497
        %v1500 = vshrl.u32 %v1417, 16
        %v1502 = vrot.slane %v1500, 4
        %v1503 = vshll.u32 %v1417, 16
        %v1505 = vrot.slane %v1503, 5
        %v1506 = vor.u32 %v1502, %v1505
        %v1507 = vrot.slane %v1506, 4
        %v1509 = vshll.u32 %v1426, 16
        %v1511 = vrot.slane %v1509, 5
        %v1512 = vsel %vm450, %v1507, %v1511
        %v1514 = vshrl.u32 %v1418, 16
        %v1516 = vrot.slane %v1514, 4
        %v1517 = vshll.u32 %v1418, 16
        %v1519 = vrot.slane %v1517, 5
        %v1520 = vor.u32 %v1516, %v1519
        %v1521 = vrot.slane %v1520, 4
        %v1523 = vshll.u32 %v1427, 16
        %v1525 = vrot.slane %v1523, 5
        %v1526 = vsel %vm450, %v1521, %v1525
        %v1528 = vshrl.u32 %v1419, 16
        %v1530 = vrot.slane %v1528, 4
        %v1531 = vshll.u32 %v1419, 16
        %v1533 = vrot.slane %v1531, 5
        %v1534 = vor.u32 %v1530, %v1533
        %v1535 = vrot.slane %v1534, 4
        %v1537 = vshll.u32 %v1428, 16
        %v1539 = vrot.slane %v1537, 5
        %v1540 = vsel %vm450, %v1535, %v1539
        %s1541 = scalar_lea.vmem %s4, 4
        %v1542 = vld [vmem:[%s1541] sm:$0xf]
        %v1543 = vunpack.c.l.b16 %v1442
        %v1544 = vunpack.c.l.b16 %v1456
        %v1545 = vunpack.c.l.b16 %v1470
        %v1546 = vunpack.c.l.b16 %v1484
        %v1547 = vunpack.c.l.b16 %v1498
        %v1548 = vunpack.c.l.b16 %v1512
        %v1549 = vunpack.c.l.b16 %v1526
        %v1550 = vunpack.c.l.b16 %v1540
        %v1551 = vpack.c.b16 %v1544, %v1543
        %v1552 = vpack.c.b16 %v1546, %v1545
        %v1553 = vpack.c.b16 %v1548, %v1547
        %v1554 = vpack.c.b16 %v1550, %v1549
        %v1556 = vsel %vm577, %v1551, 0
        %v1559 = vsel %vm577, %v1552, 0
        %v1562 = vsel %vm577, %v1553, 0
        %v1565 = vsel %vm577, %v1554, 0
        %v1568 = vsel %vm590, %v1542, 0
        %1570 = vmatpush.bf16.msra.mxu0 0
        %1571 = vmatpush.bf16.msra.mxu0 0
        %1572 = vmatpush.bf16.msra.mxu0 0
        %1573 = vmatpush.bf16.msra.mxu0 0
        %1574 = vmatpush.bf16.msra.mxu0 0
        %1575 = vmatpush.bf16.msra.mxu0 0
        %1576 = vmatpush.bf16.msra.mxu0 0
        %1577 = vmatpush.bf16.msra.mxu0 %v1568
        %1578 = vmatmul.bf16.gmra.mxu0 %v1556
        %v1579 = vpop.f32.mrf.mxu0
        %v1580 = vadd.f32 0.0, %v1579
        %v1581 = vpop.f32.mrf.mxu0
        %v1582 = vadd.f32 0.0, %v1581
        %1583 = vmatmul.bf16.gmra.mxu0 %v1559
        %v1584 = vpop.f32.mrf.mxu0
        %v1585 = vadd.f32 0.0, %v1584
        %v1586 = vpop.f32.mrf.mxu0
        %v1587 = vadd.f32 0.0, %v1586
        %1588 = vmatmul.bf16.gmra.mxu0 %v1562
        %v1589 = vpop.f32.mrf.mxu0
        %v1590 = vadd.f32 0.0, %v1589
        %v1591 = vpop.f32.mrf.mxu0
        %v1592 = vadd.f32 0.0, %v1591
        %1593 = vmatmul.bf16.gmra.mxu0 %v1565
        %v1594 = vpop.f32.mrf.mxu0
        %v1595 = vadd.f32 0.0, %v1594
        %v1596 = vpop.f32.mrf.mxu0
        %v1597 = vadd.f32 0.0, %v1596
        %1598 = vdwg.mxu0
        %v1607 = vunpack.c.l.b16 %v1412
        %v1608 = vunpack.c.l.b16 %v1413
        %v1609 = vunpack.c.l.b16 %v1414
        %v1610 = vunpack.c.l.b16 %v1415
        %v1611 = vunpack.c.l.b16 %v1416
        %v1612 = vunpack.c.l.b16 %v1417
        %v1613 = vunpack.c.l.b16 %v1418
        %v1614 = vunpack.c.l.b16 %v1419
        %v1615 = vpack.c.b16 %v1608, %v1607
        %v1616 = vpack.c.b16 %v1610, %v1609
        %v1617 = vpack.c.b16 %v1612, %v1611
        %v1618 = vpack.c.b16 %v1614, %v1613
        %v1620 = vsel %vm577, %v1615, 0
        %v1623 = vsel %vm577, %v1616, 0
        %v1626 = vsel %vm577, %v1617, 0
        %v1629 = vsel %vm577, %v1618, 0
        %v1632 = vsel %vm590, %v1420, 0
        %1634 = vmatpush.bf16.msra.mxu0 0
        %1635 = vmatpush.bf16.msra.mxu0 0
        %1636 = vmatpush.bf16.msra.mxu0 0
        %1637 = vmatpush.bf16.msra.mxu0 0
        %1638 = vmatpush.bf16.msra.mxu0 0
        %1639 = vmatpush.bf16.msra.mxu0 0
        %1640 = vmatpush.bf16.msra.mxu0 0
        %1641 = vmatpush.bf16.msra.mxu0 %v1632
        %1642 = vmatmul.bf16.gmra.mxu0 %v1620
        %v1643 = vpop.f32.mrf.mxu0
        %v1644 = vadd.f32 %v1580, %v1643
        %v1645 = vpop.f32.mrf.mxu0
        %v1646 = vadd.f32 %v1582, %v1645
        %1647 = vmatmul.bf16.gmra.mxu0 %v1623
        %v1648 = vpop.f32.mrf.mxu0
        %v1649 = vadd.f32 %v1585, %v1648
        %v1650 = vpop.f32.mrf.mxu0
        %v1651 = vadd.f32 %v1587, %v1650
        %1652 = vmatmul.bf16.gmra.mxu0 %v1626
        %v1653 = vpop.f32.mrf.mxu0
        %v1654 = vadd.f32 %v1590, %v1653
        %v1655 = vpop.f32.mrf.mxu0
        %v1656 = vadd.f32 %v1592, %v1655
        %1657 = vmatmul.bf16.gmra.mxu0 %v1629
        %v1658 = vpop.f32.mrf.mxu0
        %v1659 = vadd.f32 %v1595, %v1658
        %v1660 = vpop.f32.mrf.mxu0
        %v1661 = vadd.f32 %v1597, %v1660
        %1662 = vdwg.mxu0
        %v1663 = vld [vmem:[#allocation2] sm:$0xe]
        %v1664 = vld [vmem:[#allocation2 + $0x8] sm:$0xe]
        %v1665 = vld [vmem:[#allocation2 + $0x10] sm:$0xe]
        %v1666 = vld [vmem:[#allocation2 + $0x18] sm:$0xe]
        %v1667 = vld [vmem:[#allocation2 + $0x20] sm:$0xe]
        %v1668 = vld [vmem:[#allocation2 + $0x28] sm:$0xe]
        %v1669 = vld [vmem:[#allocation2 + $0x30] sm:$0xe]
        %v1670 = vld [vmem:[#allocation2 + $0x38] sm:$0xe]
        %vm1687 = vcmask 1042432
        %vm1688 = vcmask 1046532
        %vm1689 = vmor %vm1687, %vm1688
        %v1690 = vrot.slane %v1663, 5
        %v1691 = vrot.slane %v1690, 4
        %v1692 = vrot.slane %v1421, 5
        %v1693 = vsel %vm1689, %v1691, %v1692
        %v1694 = vrot.slane %v1664, 5
        %v1695 = vrot.slane %v1694, 4
        %v1696 = vrot.slane %v1422, 5
        %v1697 = vsel %vm1689, %v1695, %v1696
        %v1698 = vrot.slane %v1665, 5
        %v1699 = vrot.slane %v1698, 4
        %v1700 = vrot.slane %v1423, 5
        %v1701 = vsel %vm1689, %v1699, %v1700
        %v1702 = vrot.slane %v1666, 5
        %v1703 = vrot.slane %v1702, 4
        %v1704 = vrot.slane %v1424, 5
        %v1705 = vsel %vm1689, %v1703, %v1704
        %v1706 = vrot.slane %v1667, 5
        %v1707 = vrot.slane %v1706, 4
        %v1708 = vrot.slane %v1425, 5
        %v1709 = vsel %vm1689, %v1707, %v1708
        %v1710 = vrot.slane %v1668, 5
        %v1711 = vrot.slane %v1710, 4
        %v1712 = vrot.slane %v1426, 5
        %v1713 = vsel %vm1689, %v1711, %v1712
        %v1714 = vrot.slane %v1669, 5
        %v1715 = vrot.slane %v1714, 4
        %v1716 = vrot.slane %v1427, 5
        %v1717 = vsel %vm1689, %v1715, %v1716
        %v1718 = vrot.slane %v1670, 5
        %v1719 = vrot.slane %v1718, 4
        %v1720 = vrot.slane %v1428, 5
        %v1721 = vsel %vm1689, %v1719, %v1720
        %s1722 = scalar_lea.vmem %s4, 8
        %v1723 = vld [vmem:[%s1722] sm:$0xf]
        %v1724 = vunpack.c.l.b16 %v1693
        %v1725 = vunpack.c.l.b16 %v1697
        %v1726 = vunpack.c.l.b16 %v1701
        %v1727 = vunpack.c.l.b16 %v1705
        %v1728 = vunpack.c.l.b16 %v1709
        %v1729 = vunpack.c.l.b16 %v1713
        %v1730 = vunpack.c.l.b16 %v1717
        %v1731 = vunpack.c.l.b16 %v1721
        %v1732 = vpack.c.b16 %v1725, %v1724
        %v1733 = vpack.c.b16 %v1727, %v1726
        %v1734 = vpack.c.b16 %v1729, %v1728
        %v1735 = vpack.c.b16 %v1731, %v1730
        %v1737 = vsel %vm577, %v1732, 0
        %v1740 = vsel %vm577, %v1733, 0
        %v1743 = vsel %vm577, %v1734, 0
        %v1746 = vsel %vm577, %v1735, 0
        %v1749 = vsel %vm590, %v1723, 0
        %1751 = vmatpush.bf16.msra.mxu0 0
        %1752 = vmatpush.bf16.msra.mxu0 0
        %1753 = vmatpush.bf16.msra.mxu0 0
        %1754 = vmatpush.bf16.msra.mxu0 0
        %1755 = vmatpush.bf16.msra.mxu0 0
        %1756 = vmatpush.bf16.msra.mxu0 0
        %1757 = vmatpush.bf16.msra.mxu0 0
        %1758 = vmatpush.bf16.msra.mxu0 %v1749
        %1759 = vmatmul.bf16.gmra.mxu0 %v1737
        %v1760 = vpop.f32.mrf.mxu0
        %v1761 = vadd.f32 0.0, %v1760
        %v1762 = vpop.f32.mrf.mxu0
        %v1763 = vadd.f32 0.0, %v1762
        %1764 = vmatmul.bf16.gmra.mxu0 %v1740
        %v1765 = vpop.f32.mrf.mxu0
        %v1766 = vadd.f32 0.0, %v1765
        %v1767 = vpop.f32.mrf.mxu0
        %v1768 = vadd.f32 0.0, %v1767
        %1769 = vmatmul.bf16.gmra.mxu0 %v1743
        %v1770 = vpop.f32.mrf.mxu0
        %v1771 = vadd.f32 0.0, %v1770
        %v1772 = vpop.f32.mrf.mxu0
        %v1773 = vadd.f32 0.0, %v1772
        %1774 = vmatmul.bf16.gmra.mxu0 %v1746
        %v1775 = vpop.f32.mrf.mxu0
        %v1776 = vadd.f32 0.0, %v1775
        %v1777 = vpop.f32.mrf.mxu0
        %v1778 = vadd.f32 0.0, %v1777
        %1779 = vdwg.mxu0
        %v1780 = vadd.f32 %v1644, %v1761
        %v1781 = vadd.f32 %v1646, %v1763
        %v1782 = vadd.f32 %v1649, %v1766
        %v1783 = vadd.f32 %v1651, %v1768
        %v1784 = vadd.f32 %v1654, %v1771
        %v1785 = vadd.f32 %v1656, %v1773
        %v1786 = vadd.f32 %v1659, %v1776
        %v1787 = vadd.f32 %v1661, %v1778
        %v1788 = vld [vmem:[%s1361] sm:$0xf]
        %v1789 = vld [vmem:[%s1361 + $0x8] sm:$0xf]
        %v1790 = vld [vmem:[%s1361 + $0x10] sm:$0xf]
        %v1791 = vld [vmem:[%s1361 + $0x18] sm:$0xf]
        %v1792 = vld [vmem:[%s1361 + $0x20] sm:$0xf]
        %v1793 = vld [vmem:[%s1361 + $0x28] sm:$0xf]
        %v1794 = vld [vmem:[%s1361 + $0x30] sm:$0xf]
        %v1795 = vld [vmem:[%s1361 + $0x38] sm:$0xf]
        %s1796 = scalar_lea.vmem %s4, 12
        %v1797 = vld [vmem:[%s1796] sm:$0xf]
        %v1806 = vunpack.c.l.b16 %v1788
        %v1807 = vunpack.c.l.b16 %v1789
        %v1808 = vunpack.c.l.b16 %v1790
        %v1809 = vunpack.c.l.b16 %v1791
        %v1810 = vunpack.c.l.b16 %v1792
        %v1811 = vunpack.c.l.b16 %v1793
        %v1812 = vunpack.c.l.b16 %v1794
        %v1813 = vunpack.c.l.b16 %v1795
        %v1814 = vpack.c.b16 %v1807, %v1806
        %v1815 = vpack.c.b16 %v1809, %v1808
        %v1816 = vpack.c.b16 %v1811, %v1810
        %v1817 = vpack.c.b16 %v1813, %v1812
        %v1819 = vsel %vm577, %v1814, 0
        %v1822 = vsel %vm577, %v1815, 0
        %v1825 = vsel %vm577, %v1816, 0
        %v1828 = vsel %vm577, %v1817, 0
        %v1831 = vsel %vm590, %v1797, 0
        %1833 = vmatpush.bf16.msra.mxu0 0
        %1834 = vmatpush.bf16.msra.mxu0 0
        %1835 = vmatpush.bf16.msra.mxu0 0
        %1836 = vmatpush.bf16.msra.mxu0 0
        %1837 = vmatpush.bf16.msra.mxu0 0
        %1838 = vmatpush.bf16.msra.mxu0 0
        %1839 = vmatpush.bf16.msra.mxu0 0
        %1840 = vmatpush.bf16.msra.mxu0 %v1831
        %1841 = vmatmul.bf16.gmra.mxu0 %v1819
        %v1842 = vpop.f32.mrf.mxu0
        %v1843 = vadd.f32 0.0, %v1842
        %v1844 = vpop.f32.mrf.mxu0
        %v1845 = vadd.f32 0.0, %v1844
        %1846 = vmatmul.bf16.gmra.mxu0 %v1822
        %v1847 = vpop.f32.mrf.mxu0
        %v1848 = vadd.f32 0.0, %v1847
        %v1849 = vpop.f32.mrf.mxu0
        %v1850 = vadd.f32 0.0, %v1849
        %1851 = vmatmul.bf16.gmra.mxu0 %v1825
        %v1852 = vpop.f32.mrf.mxu0
        %v1853 = vadd.f32 0.0, %v1852
        %v1854 = vpop.f32.mrf.mxu0
        %v1855 = vadd.f32 0.0, %v1854
        %1856 = vmatmul.bf16.gmra.mxu0 %v1828
        %v1857 = vpop.f32.mrf.mxu0
        %v1858 = vadd.f32 0.0, %v1857
        %v1859 = vpop.f32.mrf.mxu0
        %v1860 = vadd.f32 0.0, %v1859
        %1861 = vdwg.mxu0
        %v1862 = vadd.f32 %v1780, %v1843
        %v1863 = vadd.f32 %v1781, %v1845
        %v1864 = vadd.f32 %v1782, %v1848
        %v1865 = vadd.f32 %v1783, %v1850
        %v1866 = vadd.f32 %v1784, %v1853
        %v1867 = vadd.f32 %v1785, %v1855
        %v1868 = vadd.f32 %v1786, %v1858
        %v1869 = vadd.f32 %v1787, %v1860
        %v1870 = vld [vmem:[%s1361] sm:$0xf]
        %v1871 = vld [vmem:[%s1361 + $0x4] sm:$0x1]
        %v1872 = vld [vmem:[%s1361 + $0x8] sm:$0xf]
        %v1873 = vld [vmem:[%s1361 + $0xc] sm:$0x1]
        %v1874 = vld [vmem:[%s1361 + $0x10] sm:$0xf]
        %v1875 = vld [vmem:[%s1361 + $0x14] sm:$0x1]
        %v1876 = vld [vmem:[%s1361 + $0x18] sm:$0xf]
        %v1877 = vld [vmem:[%s1361 + $0x1c] sm:$0x1]
        %v1878 = vld [vmem:[%s1361 + $0x20] sm:$0xf]
        %v1879 = vld [vmem:[%s1361 + $0x24] sm:$0x1]
        %v1880 = vld [vmem:[%s1361 + $0x28] sm:$0xf]
        %v1881 = vld [vmem:[%s1361 + $0x2c] sm:$0x1]
        %v1882 = vld [vmem:[%s1361 + $0x30] sm:$0xf]
        %v1883 = vld [vmem:[%s1361 + $0x34] sm:$0x1]
        %v1884 = vld [vmem:[%s1361 + $0x38] sm:$0xf]
        %v1885 = vld [vmem:[%s1361 + $0x3c] sm:$0x1]
        %v1887 = vshrl.u32 %v1870, 16
        %v1889 = vrot.slane %v1887, 4
        %v1890 = vshll.u32 %v1870, 16
        %v1892 = vrot.slane %v1890, 5
        %v1893 = vor.u32 %v1889, %v1892
        %v1894 = vrot.slane %v1893, 4
        %v1896 = vshll.u32 %v1871, 16
        %v1898 = vrot.slane %v1896, 5
        %v1899 = vsel %vm450, %v1894, %v1898
        %v1901 = vshrl.u32 %v1872, 16
        %v1903 = vrot.slane %v1901, 4
        %v1904 = vshll.u32 %v1872, 16
        %v1906 = vrot.slane %v1904, 5
        %v1907 = vor.u32 %v1903, %v1906
        %v1908 = vrot.slane %v1907, 4
        %v1910 = vshll.u32 %v1873, 16
        %v1912 = vrot.slane %v1910, 5
        %v1913 = vsel %vm450, %v1908, %v1912
        %v1915 = vshrl.u32 %v1874, 16
        %v1917 = vrot.slane %v1915, 4
        %v1918 = vshll.u32 %v1874, 16
        %v1920 = vrot.slane %v1918, 5
        %v1921 = vor.u32 %v1917, %v1920
        %v1922 = vrot.slane %v1921, 4
        %v1924 = vshll.u32 %v1875, 16
        %v1926 = vrot.slane %v1924, 5
        %v1927 = vsel %vm450, %v1922, %v1926
        %v1929 = vshrl.u32 %v1876, 16
        %v1931 = vrot.slane %v1929, 4
        %v1932 = vshll.u32 %v1876, 16
        %v1934 = vrot.slane %v1932, 5
        %v1935 = vor.u32 %v1931, %v1934
        %v1936 = vrot.slane %v1935, 4
        %v1938 = vshll.u32 %v1877, 16
        %v1940 = vrot.slane %v1938, 5
        %v1941 = vsel %vm450, %v1936, %v1940
        %v1943 = vshrl.u32 %v1878, 16
        %v1945 = vrot.slane %v1943, 4
        %v1946 = vshll.u32 %v1878, 16
        %v1948 = vrot.slane %v1946, 5
        %v1949 = vor.u32 %v1945, %v1948
        %v1950 = vrot.slane %v1949, 4
        %v1952 = vshll.u32 %v1879, 16
        %v1954 = vrot.slane %v1952, 5
        %v1955 = vsel %vm450, %v1950, %v1954
        %v1957 = vshrl.u32 %v1880, 16
        %v1959 = vrot.slane %v1957, 4
        %v1960 = vshll.u32 %v1880, 16
        %v1962 = vrot.slane %v1960, 5
        %v1963 = vor.u32 %v1959, %v1962
        %v1964 = vrot.slane %v1963, 4
        %v1966 = vshll.u32 %v1881, 16
        %v1968 = vrot.slane %v1966, 5
        %v1969 = vsel %vm450, %v1964, %v1968
        %v1971 = vshrl.u32 %v1882, 16
        %v1973 = vrot.slane %v1971, 4
        %v1974 = vshll.u32 %v1882, 16
        %v1976 = vrot.slane %v1974, 5
        %v1977 = vor.u32 %v1973, %v1976
        %v1978 = vrot.slane %v1977, 4
        %v1980 = vshll.u32 %v1883, 16
        %v1982 = vrot.slane %v1980, 5
        %v1983 = vsel %vm450, %v1978, %v1982
        %v1985 = vshrl.u32 %v1884, 16
        %v1987 = vrot.slane %v1985, 4
        %v1988 = vshll.u32 %v1884, 16
        %v1990 = vrot.slane %v1988, 5
        %v1991 = vor.u32 %v1987, %v1990
        %v1992 = vrot.slane %v1991, 4
        %v1994 = vshll.u32 %v1885, 16
        %v1996 = vrot.slane %v1994, 5
        %v1997 = vsel %vm450, %v1992, %v1996
        %s1998 = scalar_lea.vmem %s4, 16
        %v1999 = vld [vmem:[%s1998] sm:$0xf]
        %v2000 = vunpack.c.l.b16 %v1899
        %v2001 = vunpack.c.l.b16 %v1913
        %v2002 = vunpack.c.l.b16 %v1927
        %v2003 = vunpack.c.l.b16 %v1941
        %v2004 = vunpack.c.l.b16 %v1955
        %v2005 = vunpack.c.l.b16 %v1969
        %v2006 = vunpack.c.l.b16 %v1983
        %v2007 = vunpack.c.l.b16 %v1997
        %v2008 = vpack.c.b16 %v2001, %v2000
        %v2009 = vpack.c.b16 %v2003, %v2002
        %v2010 = vpack.c.b16 %v2005, %v2004
        %v2011 = vpack.c.b16 %v2007, %v2006
        %v2013 = vsel %vm577, %v2008, 0
        %v2016 = vsel %vm577, %v2009, 0
        %v2019 = vsel %vm577, %v2010, 0
        %v2022 = vsel %vm577, %v2011, 0
        %v2025 = vsel %vm590, %v1999, 0
        %2027 = vmatpush.bf16.msra.mxu0 0
        %2028 = vmatpush.bf16.msra.mxu0 0
        %2029 = vmatpush.bf16.msra.mxu0 0
        %2030 = vmatpush.bf16.msra.mxu0 0
        %2031 = vmatpush.bf16.msra.mxu0 0
        %2032 = vmatpush.bf16.msra.mxu0 0
        %2033 = vmatpush.bf16.msra.mxu0 0
        %2034 = vmatpush.bf16.msra.mxu0 %v2025
        %2035 = vmatmul.bf16.gmra.mxu0 %v2013
        %v2036 = vpop.f32.mrf.mxu0
        %v2037 = vadd.f32 0.0, %v2036
        %v2038 = vpop.f32.mrf.mxu0
        %v2039 = vadd.f32 0.0, %v2038
        %2040 = vmatmul.bf16.gmra.mxu0 %v2016
        %v2041 = vpop.f32.mrf.mxu0
        %v2042 = vadd.f32 0.0, %v2041
        %v2043 = vpop.f32.mrf.mxu0
        %v2044 = vadd.f32 0.0, %v2043
        %2045 = vmatmul.bf16.gmra.mxu0 %v2019
        %v2046 = vpop.f32.mrf.mxu0
        %v2047 = vadd.f32 0.0, %v2046
        %v2048 = vpop.f32.mrf.mxu0
        %v2049 = vadd.f32 0.0, %v2048
        %2050 = vmatmul.bf16.gmra.mxu0 %v2022
        %v2051 = vpop.f32.mrf.mxu0
        %v2052 = vadd.f32 0.0, %v2051
        %v2053 = vpop.f32.mrf.mxu0
        %v2054 = vadd.f32 0.0, %v2053
        %2055 = vdwg.mxu0
        %v2056 = vadd.f32 %v1862, %v2037
        %v2057 = vadd.f32 %v1863, %v2039
        %v2058 = vadd.f32 %v1864, %v2042
        %v2059 = vadd.f32 %v1865, %v2044
        %v2060 = vadd.f32 %v1866, %v2047
        %v2061 = vadd.f32 %v1867, %v2049
        %v2062 = vadd.f32 %v1868, %v2052
        %v2063 = vadd.f32 %v1869, %v2054
        %v2064 = vld [vmem:[%s1361] sm:$0xe]
        %v2065 = vld [vmem:[%s1361 + $0x8] sm:$0xe]
        %v2066 = vld [vmem:[%s1361 + $0x10] sm:$0xe]
        %v2067 = vld [vmem:[%s1361 + $0x18] sm:$0xe]
        %v2068 = vld [vmem:[%s1361 + $0x20] sm:$0xe]
        %v2069 = vld [vmem:[%s1361 + $0x28] sm:$0xe]
        %v2070 = vld [vmem:[%s1361 + $0x30] sm:$0xe]
        %v2071 = vld [vmem:[%s1361 + $0x38] sm:$0xe]
        %v2088 = vrot.slane %v2064, 5
        %v2089 = vrot.slane %v2088, 4
        %v2090 = vrot.slane %v1871, 5
        %v2091 = vsel %vm1689, %v2089, %v2090
        %v2092 = vrot.slane %v2065, 5
        %v2093 = vrot.slane %v2092, 4
        %v2094 = vrot.slane %v1873, 5
        %v2095 = vsel %vm1689, %v2093, %v2094
        %v2096 = vrot.slane %v2066, 5
        %v2097 = vrot.slane %v2096, 4
        %v2098 = vrot.slane %v1875, 5
        %v2099 = vsel %vm1689, %v2097, %v2098
        %v2100 = vrot.slane %v2067, 5
        %v2101 = vrot.slane %v2100, 4
        %v2102 = vrot.slane %v1877, 5
        %v2103 = vsel %vm1689, %v2101, %v2102
        %v2104 = vrot.slane %v2068, 5
        %v2105 = vrot.slane %v2104, 4
        %v2106 = vrot.slane %v1879, 5
        %v2107 = vsel %vm1689, %v2105, %v2106
        %v2108 = vrot.slane %v2069, 5
        %v2109 = vrot.slane %v2108, 4
        %v2110 = vrot.slane %v1881, 5
        %v2111 = vsel %vm1689, %v2109, %v2110
        %v2112 = vrot.slane %v2070, 5
        %v2113 = vrot.slane %v2112, 4
        %v2114 = vrot.slane %v1883, 5
        %v2115 = vsel %vm1689, %v2113, %v2114
        %v2116 = vrot.slane %v2071, 5
        %v2117 = vrot.slane %v2116, 4
        %v2118 = vrot.slane %v1885, 5
        %v2119 = vsel %vm1689, %v2117, %v2118
        %s2120 = scalar_lea.vmem %s4, 20
        %v2121 = vld [vmem:[%s2120] sm:$0xf]
        %v2122 = vunpack.c.l.b16 %v2091
        %v2123 = vunpack.c.l.b16 %v2095
        %v2124 = vunpack.c.l.b16 %v2099
        %v2125 = vunpack.c.l.b16 %v2103
        %v2126 = vunpack.c.l.b16 %v2107
        %v2127 = vunpack.c.l.b16 %v2111
        %v2128 = vunpack.c.l.b16 %v2115
        %v2129 = vunpack.c.l.b16 %v2119
        %v2130 = vpack.c.b16 %v2123, %v2122
        %v2131 = vpack.c.b16 %v2125, %v2124
        %v2132 = vpack.c.b16 %v2127, %v2126
        %v2133 = vpack.c.b16 %v2129, %v2128
        %v2135 = vsel %vm577, %v2130, 0
        %v2138 = vsel %vm577, %v2131, 0
        %v2141 = vsel %vm577, %v2132, 0
        %v2144 = vsel %vm577, %v2133, 0
        %v2147 = vsel %vm590, %v2121, 0
        %2149 = vmatpush.bf16.msra.mxu0 0
        %2150 = vmatpush.bf16.msra.mxu0 0
        %2151 = vmatpush.bf16.msra.mxu0 0
        %2152 = vmatpush.bf16.msra.mxu0 0
        %2153 = vmatpush.bf16.msra.mxu0 0
        %2154 = vmatpush.bf16.msra.mxu0 0
        %2155 = vmatpush.bf16.msra.mxu0 0
        %2156 = vmatpush.bf16.msra.mxu0 %v2147
        %2157 = vmatmul.bf16.gmra.mxu0 %v2135
        %v2158 = vpop.f32.mrf.mxu0
        %v2159 = vadd.f32 0.0, %v2158
        %v2160 = vpop.f32.mrf.mxu0
        %v2161 = vadd.f32 0.0, %v2160
        %2162 = vmatmul.bf16.gmra.mxu0 %v2138
        %v2163 = vpop.f32.mrf.mxu0
        %v2164 = vadd.f32 0.0, %v2163
        %v2165 = vpop.f32.mrf.mxu0
        %v2166 = vadd.f32 0.0, %v2165
        %2167 = vmatmul.bf16.gmra.mxu0 %v2141
        %v2168 = vpop.f32.mrf.mxu0
        %v2169 = vadd.f32 0.0, %v2168
        %v2170 = vpop.f32.mrf.mxu0
        %v2171 = vadd.f32 0.0, %v2170
        %2172 = vmatmul.bf16.gmra.mxu0 %v2144
        %v2173 = vpop.f32.mrf.mxu0
        %v2174 = vadd.f32 0.0, %v2173
        %v2175 = vpop.f32.mrf.mxu0
        %v2176 = vadd.f32 0.0, %v2175
        %2177 = vdwg.mxu0
        %v2178 = vadd.f32 %v2056, %v2159
        %v2179 = vadd.f32 %v2057, %v2161
        %v2180 = vadd.f32 %v2058, %v2164
        %v2181 = vadd.f32 %v2059, %v2166
        %v2182 = vadd.f32 %v2060, %v2169
        %v2183 = vadd.f32 %v2061, %v2171
        %v2184 = vadd.f32 %v2062, %v2174
        %v2185 = vadd.f32 %v2063, %v2176
        %s2186 = scalar_lea.vmem [#allocation2], 16
        %v2187 = vld [vmem:[%s2186] sm:$0xf]
        %v2188 = vld [vmem:[%s2186 + $0x8] sm:$0xf]
        %v2189 = vld [vmem:[%s2186 + $0x10] sm:$0xf]
        %v2190 = vld [vmem:[%s2186 + $0x18] sm:$0xf]
        %v2191 = vld [vmem:[%s2186 + $0x20] sm:$0xf]
        %v2192 = vld [vmem:[%s2186 + $0x28] sm:$0xf]
        %v2193 = vld [vmem:[%s2186 + $0x30] sm:$0xf]
        %v2194 = vld [vmem:[%s2186 + $0x38] sm:$0xf]
        %s2195 = scalar_lea.vmem %s4, 24
        %v2196 = vld [vmem:[%s2195] sm:$0xf]
        %v2205 = vunpack.c.l.b16 %v2187
        %v2206 = vunpack.c.l.b16 %v2188
        %v2207 = vunpack.c.l.b16 %v2189
        %v2208 = vunpack.c.l.b16 %v2190
        %v2209 = vunpack.c.l.b16 %v2191
        %v2210 = vunpack.c.l.b16 %v2192
        %v2211 = vunpack.c.l.b16 %v2193
        %v2212 = vunpack.c.l.b16 %v2194
        %v2213 = vpack.c.b16 %v2206, %v2205
        %v2214 = vpack.c.b16 %v2208, %v2207
        %v2215 = vpack.c.b16 %v2210, %v2209
        %v2216 = vpack.c.b16 %v2212, %v2211
        %v2218 = vsel %vm577, %v2213, 0
        %v2221 = vsel %vm577, %v2214, 0
        %v2224 = vsel %vm577, %v2215, 0
        %v2227 = vsel %vm577, %v2216, 0
        %v2230 = vsel %vm590, %v2196, 0
        %2232 = vmatpush.bf16.msra.mxu0 0
        %2233 = vmatpush.bf16.msra.mxu0 0
        %2234 = vmatpush.bf16.msra.mxu0 0
        %2235 = vmatpush.bf16.msra.mxu0 0
        %2236 = vmatpush.bf16.msra.mxu0 0
        %2237 = vmatpush.bf16.msra.mxu0 0
        %2238 = vmatpush.bf16.msra.mxu0 0
        %2239 = vmatpush.bf16.msra.mxu0 %v2230
        %2240 = vmatmul.bf16.gmra.mxu0 %v2218
        %v2241 = vpop.f32.mrf.mxu0
        %v2242 = vadd.f32 0.0, %v2241
        %v2243 = vpop.f32.mrf.mxu0
        %v2244 = vadd.f32 0.0, %v2243
        %2245 = vmatmul.bf16.gmra.mxu0 %v2221
        %v2246 = vpop.f32.mrf.mxu0
        %v2247 = vadd.f32 0.0, %v2246
        %v2248 = vpop.f32.mrf.mxu0
        %v2249 = vadd.f32 0.0, %v2248
        %2250 = vmatmul.bf16.gmra.mxu0 %v2224
        %v2251 = vpop.f32.mrf.mxu0
        %v2252 = vadd.f32 0.0, %v2251
        %v2253 = vpop.f32.mrf.mxu0
        %v2254 = vadd.f32 0.0, %v2253
        %2255 = vmatmul.bf16.gmra.mxu0 %v2227
        %v2256 = vpop.f32.mrf.mxu0
        %v2257 = vadd.f32 0.0, %v2256
        %v2258 = vpop.f32.mrf.mxu0
        %v2259 = vadd.f32 0.0, %v2258
        %2260 = vdwg.mxu0
        %v2261 = vadd.f32 %v2178, %v2242
        %v2262 = vadd.f32 %v2179, %v2244
        %v2263 = vadd.f32 %v2180, %v2247
        %v2264 = vadd.f32 %v2181, %v2249
        %v2265 = vadd.f32 %v2182, %v2252
        %v2266 = vadd.f32 %v2183, %v2254
        %v2267 = vadd.f32 %v2184, %v2257
        %v2268 = vadd.f32 %v2185, %v2259
        %v2269 = vld [vmem:[%s2186] sm:$0xf]
        %v2270 = vld [vmem:[%s2186 + $0x4] sm:$0x1]
        %v2271 = vld [vmem:[%s2186 + $0x8] sm:$0xf]
        %v2272 = vld [vmem:[%s2186 + $0xc] sm:$0x1]
        %v2273 = vld [vmem:[%s2186 + $0x10] sm:$0xf]
        %v2274 = vld [vmem:[%s2186 + $0x14] sm:$0x1]
        %v2275 = vld [vmem:[%s2186 + $0x18] sm:$0xf]
        %v2276 = vld [vmem:[%s2186 + $0x1c] sm:$0x1]
        %v2277 = vld [vmem:[%s2186 + $0x20] sm:$0xf]
        %v2278 = vld [vmem:[%s2186 + $0x24] sm:$0x1]
        %v2279 = vld [vmem:[%s2186 + $0x28] sm:$0xf]
        %v2280 = vld [vmem:[%s2186 + $0x2c] sm:$0x1]
        %v2281 = vld [vmem:[%s2186 + $0x30] sm:$0xf]
        %v2282 = vld [vmem:[%s2186 + $0x34] sm:$0x1]
        %v2283 = vld [vmem:[%s2186 + $0x38] sm:$0xf]
        %v2284 = vld [vmem:[%s2186 + $0x3c] sm:$0x1]
        %v2286 = vshrl.u32 %v2269, 16
        %v2288 = vrot.slane %v2286, 4
        %v2289 = vshll.u32 %v2269, 16
        %v2291 = vrot.slane %v2289, 5
        %v2292 = vor.u32 %v2288, %v2291
        %v2293 = vrot.slane %v2292, 4
        %v2295 = vshll.u32 %v2270, 16
        %v2297 = vrot.slane %v2295, 5
        %v2298 = vsel %vm450, %v2293, %v2297
        %v2300 = vshrl.u32 %v2271, 16
        %v2302 = vrot.slane %v2300, 4
        %v2303 = vshll.u32 %v2271, 16
        %v2305 = vrot.slane %v2303, 5
        %v2306 = vor.u32 %v2302, %v2305
        %v2307 = vrot.slane %v2306, 4
        %v2309 = vshll.u32 %v2272, 16
        %v2311 = vrot.slane %v2309, 5
        %v2312 = vsel %vm450, %v2307, %v2311
        %v2314 = vshrl.u32 %v2273, 16
        %v2316 = vrot.slane %v2314, 4
        %v2317 = vshll.u32 %v2273, 16
        %v2319 = vrot.slane %v2317, 5
        %v2320 = vor.u32 %v2316, %v2319
        %v2321 = vrot.slane %v2320, 4
        %v2323 = vshll.u32 %v2274, 16
        %v2325 = vrot.slane %v2323, 5
        %v2326 = vsel %vm450, %v2321, %v2325
        %v2328 = vshrl.u32 %v2275, 16
        %v2330 = vrot.slane %v2328, 4
        %v2331 = vshll.u32 %v2275, 16
        %v2333 = vrot.slane %v2331, 5
        %v2334 = vor.u32 %v2330, %v2333
        %v2335 = vrot.slane %v2334, 4
        %v2337 = vshll.u32 %v2276, 16
        %v2339 = vrot.slane %v2337, 5
        %v2340 = vsel %vm450, %v2335, %v2339
        %v2342 = vshrl.u32 %v2277, 16
        %v2344 = vrot.slane %v2342, 4
        %v2345 = vshll.u32 %v2277, 16
        %v2347 = vrot.slane %v2345, 5
        %v2348 = vor.u32 %v2344, %v2347
        %v2349 = vrot.slane %v2348, 4
        %v2351 = vshll.u32 %v2278, 16
        %v2353 = vrot.slane %v2351, 5
        %v2354 = vsel %vm450, %v2349, %v2353
        %v2356 = vshrl.u32 %v2279, 16
        %v2358 = vrot.slane %v2356, 4
        %v2359 = vshll.u32 %v2279, 16
        %v2361 = vrot.slane %v2359, 5
        %v2362 = vor.u32 %v2358, %v2361
        %v2363 = vrot.slane %v2362, 4
        %v2365 = vshll.u32 %v2280, 16
        %v2367 = vrot.slane %v2365, 5
        %v2368 = vsel %vm450, %v2363, %v2367
        %v2370 = vshrl.u32 %v2281, 16
        %v2372 = vrot.slane %v2370, 4
        %v2373 = vshll.u32 %v2281, 16
        %v2375 = vrot.slane %v2373, 5
        %v2376 = vor.u32 %v2372, %v2375
        %v2377 = vrot.slane %v2376, 4
        %v2379 = vshll.u32 %v2282, 16
        %v2381 = vrot.slane %v2379, 5
        %v2382 = vsel %vm450, %v2377, %v2381
        %v2384 = vshrl.u32 %v2283, 16
        %v2386 = vrot.slane %v2384, 4
        %v2387 = vshll.u32 %v2283, 16
        %v2389 = vrot.slane %v2387, 5
        %v2390 = vor.u32 %v2386, %v2389
        %v2391 = vrot.slane %v2390, 4
        %v2393 = vshll.u32 %v2284, 16
        %v2395 = vrot.slane %v2393, 5
        %v2396 = vsel %vm450, %v2391, %v2395
        %s2397 = scalar_lea.vmem %s4, 28
        %v2398 = vld [vmem:[%s2397] sm:$0xf]
        %v2399 = vunpack.c.l.b16 %v2298
        %v2400 = vunpack.c.l.b16 %v2312
        %v2401 = vunpack.c.l.b16 %v2326
        %v2402 = vunpack.c.l.b16 %v2340
        %v2403 = vunpack.c.l.b16 %v2354
        %v2404 = vunpack.c.l.b16 %v2368
        %v2405 = vunpack.c.l.b16 %v2382
        %v2406 = vunpack.c.l.b16 %v2396
        %v2407 = vpack.c.b16 %v2400, %v2399
        %v2408 = vpack.c.b16 %v2402, %v2401
        %v2409 = vpack.c.b16 %v2404, %v2403
        %v2410 = vpack.c.b16 %v2406, %v2405
        %v2412 = vsel %vm577, %v2407, 0
        %v2415 = vsel %vm577, %v2408, 0
        %v2418 = vsel %vm577, %v2409, 0
        %v2421 = vsel %vm577, %v2410, 0
        %v2424 = vsel %vm590, %v2398, 0
        %2426 = vmatpush.bf16.msra.mxu0 0
        %2427 = vmatpush.bf16.msra.mxu0 0
        %2428 = vmatpush.bf16.msra.mxu0 0
        %2429 = vmatpush.bf16.msra.mxu0 0
        %2430 = vmatpush.bf16.msra.mxu0 0
        %2431 = vmatpush.bf16.msra.mxu0 0
        %2432 = vmatpush.bf16.msra.mxu0 0
        %2433 = vmatpush.bf16.msra.mxu0 %v2424
        %2434 = vmatmul.bf16.gmra.mxu0 %v2412
        %v2435 = vpop.f32.mrf.mxu0
        %v2436 = vadd.f32 0.0, %v2435
        %v2437 = vpop.f32.mrf.mxu0
        %v2438 = vadd.f32 0.0, %v2437
        %2439 = vmatmul.bf16.gmra.mxu0 %v2415
        %v2440 = vpop.f32.mrf.mxu0
        %v2441 = vadd.f32 0.0, %v2440
        %v2442 = vpop.f32.mrf.mxu0
        %v2443 = vadd.f32 0.0, %v2442
        %2444 = vmatmul.bf16.gmra.mxu0 %v2418
        %v2445 = vpop.f32.mrf.mxu0
        %v2446 = vadd.f32 0.0, %v2445
        %v2447 = vpop.f32.mrf.mxu0
        %v2448 = vadd.f32 0.0, %v2447
        %2449 = vmatmul.bf16.gmra.mxu0 %v2421
        %v2450 = vpop.f32.mrf.mxu0
        %v2451 = vadd.f32 0.0, %v2450
        %v2452 = vpop.f32.mrf.mxu0
        %v2453 = vadd.f32 0.0, %v2452
        %2454 = vdwg.mxu0
        %v2455 = vadd.f32 %v2261, %v2436
        %v2456 = vadd.f32 %v2262, %v2438
        %v2457 = vadd.f32 %v2263, %v2441
        %v2458 = vadd.f32 %v2264, %v2443
        %v2459 = vadd.f32 %v2265, %v2446
        %v2460 = vadd.f32 %v2266, %v2448
        %v2461 = vadd.f32 %v2267, %v2451
        %v2462 = vadd.f32 %v2268, %v2453
        %v2463 = vld [vmem:[%s2186] sm:$0xe]
        %v2464 = vld [vmem:[%s2186 + $0x8] sm:$0xe]
        %v2465 = vld [vmem:[%s2186 + $0x10] sm:$0xe]
        %v2466 = vld [vmem:[%s2186 + $0x18] sm:$0xe]
        %v2467 = vld [vmem:[%s2186 + $0x20] sm:$0xe]
        %v2468 = vld [vmem:[%s2186 + $0x28] sm:$0xe]
        %v2469 = vld [vmem:[%s2186 + $0x30] sm:$0xe]
        %v2470 = vld [vmem:[%s2186 + $0x38] sm:$0xe]
        %v2487 = vrot.slane %v2463, 5
        %v2488 = vrot.slane %v2487, 4
        %v2489 = vrot.slane %v2270, 5
        %v2490 = vsel %vm1689, %v2488, %v2489
        %v2491 = vrot.slane %v2464, 5
        %v2492 = vrot.slane %v2491, 4
        %v2493 = vrot.slane %v2272, 5
        %v2494 = vsel %vm1689, %v2492, %v2493
        %v2495 = vrot.slane %v2465, 5
        %v2496 = vrot.slane %v2495, 4
        %v2497 = vrot.slane %v2274, 5
        %v2498 = vsel %vm1689, %v2496, %v2497
        %v2499 = vrot.slane %v2466, 5
        %v2500 = vrot.slane %v2499, 4
        %v2501 = vrot.slane %v2276, 5
        %v2502 = vsel %vm1689, %v2500, %v2501
        %v2503 = vrot.slane %v2467, 5
        %v2504 = vrot.slane %v2503, 4
        %v2505 = vrot.slane %v2278, 5
        %v2506 = vsel %vm1689, %v2504, %v2505
        %v2507 = vrot.slane %v2468, 5
        %v2508 = vrot.slane %v2507, 4
        %v2509 = vrot.slane %v2280, 5
        %v2510 = vsel %vm1689, %v2508, %v2509
        %v2511 = vrot.slane %v2469, 5
        %v2512 = vrot.slane %v2511, 4
        %v2513 = vrot.slane %v2282, 5
        %v2514 = vsel %vm1689, %v2512, %v2513
        %v2515 = vrot.slane %v2470, 5
        %v2516 = vrot.slane %v2515, 4
        %v2517 = vrot.slane %v2284, 5
        %v2518 = vsel %vm1689, %v2516, %v2517
        %s2519 = scalar_lea.vmem %s4, 32
        %v2520 = vld [vmem:[%s2519] sm:$0xf]
        %v2521 = vunpack.c.l.b16 %v2490
        %v2522 = vunpack.c.l.b16 %v2494
        %v2523 = vunpack.c.l.b16 %v2498
        %v2524 = vunpack.c.l.b16 %v2502
        %v2525 = vunpack.c.l.b16 %v2506
        %v2526 = vunpack.c.l.b16 %v2510
        %v2527 = vunpack.c.l.b16 %v2514
        %v2528 = vunpack.c.l.b16 %v2518
        %v2529 = vpack.c.b16 %v2522, %v2521
        %v2530 = vpack.c.b16 %v2524, %v2523
        %v2531 = vpack.c.b16 %v2526, %v2525
        %v2532 = vpack.c.b16 %v2528, %v2527
        %v2534 = vsel %vm577, %v2529, 0
        %v2537 = vsel %vm577, %v2530, 0
        %v2540 = vsel %vm577, %v2531, 0
        %v2543 = vsel %vm577, %v2532, 0
        %v2546 = vsel %vm590, %v2520, 0
        %2548 = vmatpush.bf16.msra.mxu0 0
        %2549 = vmatpush.bf16.msra.mxu0 0
        %2550 = vmatpush.bf16.msra.mxu0 0
        %2551 = vmatpush.bf16.msra.mxu0 0
        %2552 = vmatpush.bf16.msra.mxu0 0
        %2553 = vmatpush.bf16.msra.mxu0 0
        %2554 = vmatpush.bf16.msra.mxu0 0
        %2555 = vmatpush.bf16.msra.mxu0 %v2546
        %2556 = vmatmul.bf16.gmra.mxu0 %v2534
        %v2557 = vpop.f32.mrf.mxu0
        %v2558 = vadd.f32 0.0, %v2557
        %v2559 = vpop.f32.mrf.mxu0
        %v2560 = vadd.f32 0.0, %v2559
        %2561 = vmatmul.bf16.gmra.mxu0 %v2537
        %v2562 = vpop.f32.mrf.mxu0
        %v2563 = vadd.f32 0.0, %v2562
        %v2564 = vpop.f32.mrf.mxu0
        %v2565 = vadd.f32 0.0, %v2564
        %2566 = vmatmul.bf16.gmra.mxu0 %v2540
        %v2567 = vpop.f32.mrf.mxu0
        %v2568 = vadd.f32 0.0, %v2567
        %v2569 = vpop.f32.mrf.mxu0
        %v2570 = vadd.f32 0.0, %v2569
        %2571 = vmatmul.bf16.gmra.mxu0 %v2543
        %v2572 = vpop.f32.mrf.mxu0
        %v2573 = vadd.f32 0.0, %v2572
        %v2574 = vpop.f32.mrf.mxu0
        %v2575 = vadd.f32 0.0, %v2574
        %2576 = vdwg.mxu0
        %v2577 = vadd.f32 %v2455, %v2558
        %v2578 = vadd.f32 %v2456, %v2560
        %v2579 = vadd.f32 %v2457, %v2563
        %v2580 = vadd.f32 %v2458, %v2565
        %v2581 = vadd.f32 %v2459, %v2568
        %v2582 = vadd.f32 %v2460, %v2570
        %v2583 = vadd.f32 %v2461, %v2573
        %v2584 = vadd.f32 %v2462, %v2575
        %v2585 = vld [vmem:[%s5] sm:$0x1]
        %v2587 = vperm.slane %v2585, 0
        %v2589 = vmul.f32 %v2577, %v2587
        %v2590 = vmul.f32 %v2578, %v2587
        %v2591 = vmul.f32 %v2579, %v2587
        %v2592 = vmul.f32 %v2580, %v2587
        %v2593 = vmul.f32 %v2581, %v2587
        %v2594 = vmul.f32 %v2582, %v2587
        %v2595 = vmul.f32 %v2583, %v2587
        %v2596 = vmul.f32 %v2584, %v2587
        %v2597 = vld [vmem:[%s6] sm:$0x1]
        %v2599 = vperm.slane %v2597, 0
        %v2601 = vadd.f32 %v2589, %v2599
        %v2602 = vadd.f32 %v2590, %v2599
        %v2603 = vadd.f32 %v2591, %v2599
        %v2604 = vadd.f32 %v2592, %v2599
        %v2605 = vadd.f32 %v2593, %v2599
        %v2606 = vadd.f32 %v2594, %v2599
        %v2607 = vadd.f32 %v2595, %v2599
        %v2608 = vadd.f32 %v2596, %v2599
        %v2609 = vld [vmem:[%s687] sm:$0xf]
        %v2610 = vld [vmem:[%s687 + $0x10] sm:$0xf]
        %v2611 = vld [vmem:[%s687 + $0x20] sm:$0xf]
        %v2612 = vld [vmem:[%s687 + $0x30] sm:$0xf]
        %v2613 = vld [vmem:[%s687 + $0x40] sm:$0xf]
        %v2614 = vld [vmem:[%s687 + $0x50] sm:$0xf]
        %v2615 = vld [vmem:[%s687 + $0x60] sm:$0xf]
        %v2616 = vld [vmem:[%s687 + $0x70] sm:$0xf]
        %v2617 = vld [vmem:[%s7] sm:$0xf]
        %v2626 = vunpack.c.l.b16 %v2609
        %v2627 = vunpack.c.l.b16 %v2610
        %v2628 = vunpack.c.l.b16 %v2611
        %v2629 = vunpack.c.l.b16 %v2612
        %v2630 = vunpack.c.l.b16 %v2613
        %v2631 = vunpack.c.l.b16 %v2614
        %v2632 = vunpack.c.l.b16 %v2615
        %v2633 = vunpack.c.l.b16 %v2616
        %v2634 = vpack.c.b16 %v2627, %v2626
        %v2635 = vpack.c.b16 %v2629, %v2628
        %v2636 = vpack.c.b16 %v2631, %v2630
        %v2637 = vpack.c.b16 %v2633, %v2632
        %v2639 = vsel %vm577, %v2634, 0
        %v2642 = vsel %vm577, %v2635, 0
        %v2645 = vsel %vm577, %v2636, 0
        %v2648 = vsel %vm577, %v2637, 0
        %v2651 = vsel %vm590, %v2617, 0
        %2653 = vmatpush.bf16.msra.mxu0 0
        %2654 = vmatpush.bf16.msra.mxu0 0
        %2655 = vmatpush.bf16.msra.mxu0 0
        %2656 = vmatpush.bf16.msra.mxu0 0
        %2657 = vmatpush.bf16.msra.mxu0 0
        %2658 = vmatpush.bf16.msra.mxu0 0
        %2659 = vmatpush.bf16.msra.mxu0 0
        %2660 = vmatpush.bf16.msra.mxu0 %v2651
        %2661 = vmatmul.bf16.gmra.mxu0 %v2639
        %v2662 = vpop.f32.mrf.mxu0
        %v2663 = vadd.f32 0.0, %v2662
        %v2664 = vpop.f32.mrf.mxu0
        %v2665 = vadd.f32 0.0, %v2664
        %2666 = vmatmul.bf16.gmra.mxu0 %v2642
        %v2667 = vpop.f32.mrf.mxu0
        %v2668 = vadd.f32 0.0, %v2667
        %v2669 = vpop.f32.mrf.mxu0
        %v2670 = vadd.f32 0.0, %v2669
        %2671 = vmatmul.bf16.gmra.mxu0 %v2645
        %v2672 = vpop.f32.mrf.mxu0
        %v2673 = vadd.f32 0.0, %v2672
        %v2674 = vpop.f32.mrf.mxu0
        %v2675 = vadd.f32 0.0, %v2674
        %2676 = vmatmul.bf16.gmra.mxu0 %v2648
        %v2677 = vpop.f32.mrf.mxu0
        %v2678 = vadd.f32 0.0, %v2677
        %v2679 = vpop.f32.mrf.mxu0
        %v2680 = vadd.f32 0.0, %v2679
        %2681 = vdwg.mxu0
        %v2682 = vld [vmem:[%s8] sm:$0x1]
        %v2684 = vperm.slane %v2682, 0
        %v2686 = vmul.f32 %v2663, %v2684
        %v2687 = vmul.f32 %v2665, %v2684
        %v2688 = vmul.f32 %v2668, %v2684
        %v2689 = vmul.f32 %v2670, %v2684
        %v2690 = vmul.f32 %v2673, %v2684
        %v2691 = vmul.f32 %v2675, %v2684
        %v2692 = vmul.f32 %v2678, %v2684
        %v2693 = vmul.f32 %v2680, %v2684
        %v2694 = vld [vmem:[%s9] sm:$0x1]
        %v2696 = vperm.slane %v2694, 0
        %v2698 = vadd.f32 %v2686, %v2696
        %v2699 = vadd.f32 %v2687, %v2696
        %v2700 = vadd.f32 %v2688, %v2696
        %v2701 = vadd.f32 %v2689, %v2696
        %v2702 = vadd.f32 %v2690, %v2696
        %v2703 = vadd.f32 %v2691, %v2696
        %v2704 = vadd.f32 %v2692, %v2696
        %v2705 = vadd.f32 %v2693, %v2696
        %v2706 = vadd.f32 %v2601, %v2698
        %v2707 = vadd.f32 %v2602, %v2699
        %v2708 = vadd.f32 %v2603, %v2700
        %v2709 = vadd.f32 %v2604, %v2701
        %v2710 = vadd.f32 %v2605, %v2702
        %v2711 = vadd.f32 %v2606, %v2703
        %v2712 = vadd.f32 %v2607, %v2704
        %v2713 = vadd.f32 %v2608, %v2705
        %v2714 = vmax.f32 %v2706, 0.0
        %v2715 = vmax.f32 %v2707, 0.0
        %v2716 = vmax.f32 %v2708, 0.0
        %v2717 = vmax.f32 %v2709, 0.0
        %v2718 = vmax.f32 %v2710, 0.0
        %v2719 = vmax.f32 %v2711, 0.0
        %v2720 = vmax.f32 %v2712, 0.0
        %v2721 = vmax.f32 %v2713, 0.0
        %2722 = vst.msk [vmem:[%s352] sm:$0xff] %vm577, %v2714
        %2723 = vst.msk [vmem:[%s352 + $0x8] sm:$0xff] %vm577, %v2715
        %2724 = vst.msk [vmem:[%s352 + $0x10] sm:$0xff] %vm577, %v2716
        %2725 = vst.msk [vmem:[%s352 + $0x18] sm:$0xff] %vm577, %v2717
        %2726 = vst.msk [vmem:[%s352 + $0x20] sm:$0xff] %vm577, %v2718
        %2727 = vst.msk [vmem:[%s352 + $0x28] sm:$0xff] %vm577, %v2719
        %2728 = vst.msk [vmem:[%s352 + $0x30] sm:$0xff] %vm577, %v2720
        %2729 = vst.msk [vmem:[%s352 + $0x38] sm:$0xff] %vm577, %v2721
        %s2730 = sand.u32 %s247, 1
        %s2731 = scalar_lea.sflag [#allocation4], %s2730
        %s2732 = sand.u32 %s247, 1
        %s2733 = smul.addr %s2732, 64
        %s2734 = scalar_lea.vmem [#allocation3], %s2733
        // Predicated region
        $region61: #{tpu_custom_call.1} parent=59 // pred_check
          %p2735 = pneg %p257
        $region62: #{tpu_custom_call.1} parent=59 // pred_check_branch
          %2737 = sbr.rel (%p2735) target = $region64
        $region63: #{tpu_custom_call.1} parent=59 // pred_region
          %2739 = vsyncadd %s2731, 0
          %s2740 = smul.addr %s24, 8
          %s2741 = smul.addr %s2740, 8
          %s2742 = scalar_lea.hbm %s10, %s2741
          %s2743 = sshll.u32 %s2734, 4
          %s2744 = int_to_ptr.vmem [resolvable:$true] %s2743
          %s2745 = sshll.u32 %s2742, 4
          %s2746 = int_to_ptr.hbm [resolvable:$true] %s2745
          %2751 = dma.vmem_to_hbm [thread:$0]  %s2744, 1024, %s2746, %s2731, 128, 128, 8
        $region64: #{tpu_custom_call.1} parent=59 // pred_fallthru
          _
      $region60: #{tpu_custom_call.1} parent=5 // pred_fallthru
        _
      %p2752 = scmp.le.s32.totalorder 2, %s19
      // Predicated region
      $region65: #{tpu_custom_call.1} parent=5 // pred_check
        %p2753 = pneg %p2752
      $region66: #{tpu_custom_call.1} parent=5 // pred_check_branch
        %2755 = sbr.rel (%p2753) target = $region68
      $region67: #{tpu_custom_call.1} parent=5 // pred_region
        %s2756 = ssub.s32 %s19, 2
        // Predicated region
        $region69: #{tpu_custom_call.1} parent=67 // pred_check
          %p2757 = pneg %p263
        $region70: #{tpu_custom_call.1} parent=67 // pred_check_branch
          %2759 = sbr.rel (%p2757) target = $region72
        $region71: #{tpu_custom_call.1} parent=67 // pred_region
          %s2760 = sand.u32 %s248, 1
          %s2761 = scalar_lea.sflag [#allocation4], %s2760
          %s2762 = sand.u32 %s248, 1
          %s2763 = smul.addr %s2762, 64
          %s2764 = scalar_lea.vmem [#allocation3], %s2763
          %2766 = dma.done %s2761, 1024
        $region72: #{tpu_custom_call.1} parent=67 // pred_fallthru
          _
      $region68: #{tpu_custom_call.1} parent=5 // pred_fallthru
        _
    $region6: #{tpu_custom_call.1} parent=1 // loop_footer
      %s23 = sadd.s32 1, %s19
    $region7: #{tpu_custom_call.1} parent=1 // loop_footer_branch
      %18 = sbr.rel target = $region3
    $region8: #{tpu_custom_call.1} parent=1 // loop_exit
      _
    %2767 = vsyncpa [#allocation4], 1
    %s2768 = scalar_lea.sflag [#allocation4], 1
    %2769 = vsyncpa %s2768, 1

</llo_original>
